<compile_context>
chip_gen: v6e
topology: v6e:2x2x1
jax: 0.10.0
libtpu: 0.0.40
codegen_flags: <defaults>
</compile_context>

<pallas_src>
import jax
import jax.numpy as jnp
from jax import lax
from jax.experimental import pallas as pl
from jax.experimental.pallas import tpu as pltpu


def memory_kernel(lens_ref, kb_ref, q_ref, w1m_ref, w1q_ref, w2_ref, w3_ref, out_ref):
    """
    lens_ref : (B,)          int32 kb_lens, scalar-prefetched into SMEM
    kb_ref   : (bt, M, T, E) kb_token_features block
    q_ref    : (bt, 1, Q)    query block
    w1m_ref  : (E, H*Q)      first Linear, mem rows of all hops fused column-wise
    w1q_ref  : (H, Q, Q)     first Linear, query rows per hop
    w2_ref   : (H, Q, A)     second Linear per hop
    w3_ref   : (H, 1, A)     third Linear per hop (single output column, stored as a row)
    out_ref  : (bt, 1, E)    tvec from the final hop
    """
    bt, M, T, E = kb_ref.shape
    Q = q_ref.shape[-1]
    H = w2_ref.shape[0]
    A = w2_ref.shape[-1]
    cdt = w1m_ref.dtype                                   # MXU operand dtype (bf16-ready)

    # 1) Fused mean over tokens: torch.mean(kb_token_features, dim=2).
    #    Keep exactly two live copies of mem: f32 for the tvec readout, compute dtype for the MXU.
    mem_f32 = jnp.mean(kb_ref[...].astype(jnp.float32), axis=2)           # (bt, M, E)
    mem2d_c = mem_f32.reshape(bt * M, E).astype(cdt)                       # (bt*M, E)

    q = q_ref[...][:, 0, :].astype(jnp.float32)                            # (bt, Q)

    # 2) Hop-invariant GEMM hoisted out of the hop loop:
    #    hm_all[:, h*Q:(h+1)*Q] == mem @ W1_mem^(h)   (one wide matmul instead of H skinny ones)
    hm_all = jnp.dot(mem2d_c, w1m_ref[...], preferred_element_type=jnp.float32)  # (bt*M, H*Q)

    # 3) Sequence mask from SMEM kb_lens (create_sequence_mask: row_vector < kb_lens).
    b0 = pl.program_id(0) * bt
    batch_idx = lax.broadcasted_iota(jnp.int32, (bt, M), 0)
    row_idx = lax.broadcasted_iota(jnp.int32, (bt, M), 1)
    lens_bcast = jnp.zeros((bt, M), jnp.int32)
    for i in range(bt):                                    # bt is static; scalar splat + select
        lens_bcast = jnp.where(batch_idx == i, lens_ref[b0 + i], lens_bcast)
    valid = row_idx < lens_bcast                                           # (bt, M)

    tvec = jnp.zeros((bt, E), jnp.float32)
    for h in range(H):                                     # hops is a static Python int
        # h1 = tanh(cat([mem, q]) @ W1) == tanh(mem @ W1_mem + q @ W1_q)   (no concat/broadcast)
        hm = hm_all[:, h * Q:(h + 1) * Q]                                  # (bt*M, Q)
        hq = jnp.dot(q.astype(cdt), w1q_ref[h], preferred_element_type=jnp.float32)  # (bt, Q)
        h1 = jnp.tanh(hm.reshape(bt, M, Q) + hq[:, None, :])               # (bt, M, Q)
        h2 = jnp.tanh(jnp.dot(h1.reshape(bt * M, Q).astype(cdt), w2_ref[h],
                              preferred_element_type=jnp.float32))         # (bt*M, A)
        # Third Linear has a single output column -> VPU weighted sum + lane reduce (MXU stays
        # free). Revisit as an MXU contraction if A grows to hundreds of lanes.
        logits = jnp.sum(h2.reshape(bt, M, A) * w3_ref[h].astype(jnp.float32),
                         axis=-1)                                          # (bt, M)

        # masked_softmax(memory_efficient=True): masked_fill(-1e32) then softmax over dim=1
        masked = jnp.where(valid, logits, jnp.float32(-1e32))
        mmax = jnp.max(masked, axis=1, keepdims=True)
        p = jnp.exp(masked - mmax)
        tdist = p / jnp.sum(p, axis=1, keepdims=True)                      # (bt, M)

        # tvec = bmm(tdist.unsqueeze(1), memory_contents).squeeze(1)
        if M >= 128:
            # Large M: contract on the MXU instead of a (bt, M, E) VPU broadcast + reduce.
            tvec = lax.dot_general(
                tdist[:, None, :], mem_f32,
                dimension_numbers=(((2,), (1,)), ((0,), (0,))),
                preferred_element_type=jnp.float32)[:, 0, :]               # (bt, E)
        else:
            tvec = jnp.sum(tdist[:, :, None] * mem_f32, axis=1)            # (bt, E)
        q = q + tvec                                       # requires Q == E

    out_ref[...] = tvec[:, None, :].astype(out_ref.dtype)


def memory_module_forward(query, kb_token_features, kb_lens, w1, w2, w3,
                          *, b_tile=None, target_rows=256):
    """JAX wrapper. kb_type_features is unused by the PyTorch forward and is omitted.

    target_rows: desired bt*M per grid step (256 fills v6e/v7x MXU rows; 128 is enough on v5e).
    """
    B, M, T, E = kb_token_features.shape
    Q = query.shape[-1]
    H = w1.shape[0]
    A = w2.shape[-1]
    assert Q == E, "query = query + tvec requires emb_size == 2 * enc_hid_size"
    assert w1.shape == (H, E + Q, Q) and w2.shape == (H, Q, A) and w3.shape == (H, A, 1)

    kb_item = jnp.dtype(kb_token_features.dtype).itemsize
    w_item = jnp.dtype(w1.dtype).itemsize

    # ---- batch-tile selection ---------------------------------------------------------------
    if b_tile is None:
        want = max(1, -(-target_rows // M))                 # ceil: fill MXU rows
        kb_blk_budget = 20 << 20                            # budget for the double-buffered kb block
        cap = max(1, kb_blk_budget // (2 * M * T * E * kb_item))
        bt = max(1, min(B, want, cap))
        while B % bt != 0:                                   # largest divisor of B <= bt
            bt -= 1
        # v7x has 2 TensorCores: prefer >= 2 "parallel" grid steps when it doesn't hurt MXU fill.
        if B // bt == 1 and bt % 2 == 0 and (bt // 2) * M >= 128:
            bt //= 2
    else:
        bt = b_tile
        assert B % bt == 0
    nb = B // bt

    # ---- explicit VMEM limit (scoped default is 16/32 MiB, far below physical) ---------------
    blk = 2 * (bt * M * T * E * kb_item + bt * Q * 4 + bt * E * 4)          # double-buffered I/O
    wts = (E * H * Q + H * Q * Q + H * Q * A + H * A) * w_item              # resident weights
    inter = bt * M * (E * 4 + E * w_item + H * Q * 4 + Q * 4 + A * 4)       # live intermediates
    vmem_limit = int(min(max(int(1.5 * (blk + 2 * wts + inter)), 16 << 20), 48 << 20))

    # ---- weight re-layout (split first Linear; fuse its mem part across hops) ----------------
    w1_mem_all = jnp.transpose(w1[:, :E, :], (1, 0, 2)).reshape(E, H * Q)   # (E, H*Q)
    w1_q = w1[:, E:, :]                                                      # (H, Q, Q)
    w3_row = jnp.transpose(w3, (0, 2, 1))                                    # (H, 1, A)
    q3 = query.reshape(B, 1, Q)
    lens_i32 = kb_lens.astype(jnp.int32).reshape(B)

    out_shape = jax.ShapeDtypeStruct((B, 1, E), jnp.float32)

    def run(use_buffered):
        def wspec(shape):
            idx = lambda b, lens, _n=len(shape): (0,) * _n
            if use_buffered:
                # Grid-invariant weights: single-buffer to halve their VMEM residency (v7x).
                return pl.BlockSpec(shape, idx, pipeline_mode=pl.Buffered(1))
            return pl.BlockSpec(shape, idx)

        grid_spec = pltpu.PrefetchScalarGridSpec(
            num_scalar_prefetch=1,                          # kb_lens -> SMEM, free scalar reads
            grid=(nb,),
            in_specs=[
                pl.BlockSpec((bt, M, T, E), lambda b, lens: (b, 0, 0, 0)),   # kb (fused mean)
                pl.BlockSpec((bt, 1, Q), lambda b, lens: (b, 0, 0)),          # query
                wspec((E, H * Q)),                                            # w1_mem (fused)
                wspec((H, Q, Q)),                                             # w1_q
                wspec((H, Q, A)),                                             # w2
                wspec((H, 1, A)),                                             # w3 (row form)
            ],
            out_specs=pl.BlockSpec((bt, 1, E), lambda b, lens: (b, 0, 0)),
        )
        return pl.pallas_call(
            memory_kernel,
            out_shape=out_shape,
            grid_spec=grid_spec,
            compiler_params=pltpu.CompilerParams(
                dimension_semantics=("parallel",),
                vmem_limit_bytes=vmem_limit),
        )(lens_i32, kb_token_features, q3, w1_mem_all, w1_q, w2, w3_row)

    try:
        out = run(use_buffered=hasattr(pl, "Buffered"))
    except Exception:
        out = run(use_buffered=False)     # fallback if single-buffered weight specs are rejected
    return out.reshape(B, E)


def _reference_forward(query, kb, kb_lens, w1, w2, w3):
    """Pure-JAX reference of the PyTorch forward (for a correctness check)."""
    mem = jnp.mean(kb, axis=2)
    B, M, _ = mem.shape
    mask = jnp.arange(M)[None, :] < kb_lens[:, None]
    q = query
    tvec = None
    for h in range(w1.shape[0]):
        x = jnp.concatenate(
            [mem, jnp.broadcast_to(q[:, None, :], (B, M, q.shape[-1]))], axis=2)
        h1 = jnp.tanh(x @ w1[h])
        h2 = jnp.tanh(h1 @ w2[h])
        logits = (h2 @ w3[h])[..., 0]
        masked = jnp.where(mask, logits, jnp.float32(-1e32))
        tdist = jax.nn.softmax(masked, axis=1)
        tvec = jnp.einsum("bm,bme->be", tdist, mem)
        q = q + tvec
    return tvec


if __name__ == "__main__":
    key = jax.random.PRNGKey(0)
    ks = jax.random.split(key, 8)

    # Small, module-consistent shapes
    B, M, T = 2, 8, 5          # batch, kb rows, tokens per kb row
    enc_hid = 16
    Q = 2 * enc_hid            # qsize = enc_hid_size * 2 = 32
    E = Q                      # emb_size (must equal qsize: query = query + tvec)
    A = 16                     # attn_size
    HOPS = 3                   # mem_hops

    query = jax.random.normal(ks[0], (B, Q), jnp.float32)
    kb_token_features = jax.random.normal(ks[1], (B, M, T, E), jnp.float32)
    kb_type_features = jax.random.normal(ks[2], (B, M, T, E), jnp.float32)  # unused in forward
    # max(kb_lens) must equal M (as implicitly assumed by the PyTorch code)
    kb_lens = jnp.array([M, M - 3], dtype=jnp.int32)

    # Deterministic bias-free Linear weights, stored as (in, out) per hop
    def lin_init(k, fan_in, shape):
        bound = 1.0 / (fan_in ** 0.5)
        return jax.random.uniform(k, shape, jnp.float32, -bound, bound)

    w1 = lin_init(ks[3], E + Q, (HOPS, E + Q, Q))
    w2 = lin_init(ks[4], Q, (HOPS, Q, A))
    w3 = lin_init(ks[5], A, (HOPS, A, 1))

    out = memory_module_forward(query, kb_token_features, kb_lens, w1, w2, w3)
    jax.block_until_ready(out)
    assert out.shape == (B, E) and out.dtype == jnp.float32

    ref = _reference_forward(query, kb_token_features, kb_lens, w1, w2, w3)
    assert jnp.allclose(out, ref, atol=2e-2, rtol=2e-2), "kernel does not match reference"
    print("KERNEL_OK")
</pallas_src>

<mosaic_0001>
module attributes {stable_mosaic.version = 11 : i64} {
  func.func @memory_kernel(%arg0: i32, %arg1: memref<2xi32, #tpu.memory_space<smem>>, %arg2: memref<2x8x5x32xf32, #tpu.memory_space<vmem>>, %arg3: memref<2x1x32xf32, #tpu.memory_space<vmem>>, %arg4: memref<32x96xf32, #tpu.memory_space<vmem>>, %arg5: memref<3x32x32xf32, #tpu.memory_space<vmem>>, %arg6: memref<3x32x16xf32, #tpu.memory_space<vmem>>, %arg7: memref<3x1x16xf32, #tpu.memory_space<vmem>>, %arg8: memref<2x1x32xf32, #tpu.memory_space<vmem>>) attributes {dimension_semantics = [#tpu.dimension_semantics<parallel>], iteration_bounds = array<i64: 1>, scalar_prefetch = 1 : i64, scratch_operands = 0 : i64, tpu.core_type = #tpu.core_type<tc>, window_params = [{transform_indices = @transform_0, window_bounds = array<i64: 2, 8, 5, 32>}, {transform_indices = @transform_1, window_bounds = array<i64: 2, 1, 32>}, {pipeline_mode = #tpu.pipeline_mode<synchronous>, transform_indices = @transform_2, window_bounds = array<i64: 32, 96>}, {pipeline_mode = #tpu.pipeline_mode<synchronous>, transform_indices = @transform_3, window_bounds = array<i64: 3, 32, 32>}, {pipeline_mode = #tpu.pipeline_mode<synchronous>, transform_indices = @transform_4, window_bounds = array<i64: 3, 32, 16>}, {pipeline_mode = #tpu.pipeline_mode<synchronous>, transform_indices = @transform_5, window_bounds = array<i64: 3, 1, 16>}, {transform_indices = @transform_6, window_bounds = array<i64: 2, 1, 32>}]} {
    %c0 = arith.constant 0 : index
    %c0_0 = arith.constant 0 : index
    %c0_1 = arith.constant 0 : index
    %c0_2 = arith.constant 0 : index
    %0 = vector.load %arg2[%c0, %c0_0, %c0_1, %c0_2] : memref<2x8x5x32xf32, #tpu.memory_space<vmem>>, vector<2x8x5x32xf32>
    %cst = arith.constant dense<0.000000e+00> : vector<2x8x32xf32>
    %1 = vector.multi_reduction <add>, %0, %cst [2] : vector<2x8x5x32xf32> to vector<2x8x32xf32>
    %cst_3 = arith.constant 5.000000e+00 : f32
    %2 = vector.broadcast %cst_3 : f32 to vector<2x8x32xf32>
    %3 = arith.divf %1, %2 : vector<2x8x32xf32>
    %4 = vector.shape_cast %3 : vector<2x8x32xf32> to vector<16x32xf32>
    %c0_4 = arith.constant 0 : index
    %c0_5 = arith.constant 0 : index
    %c0_6 = arith.constant 0 : index
    %5 = vector.load %arg3[%c0_4, %c0_5, %c0_6] : memref<2x1x32xf32, #tpu.memory_space<vmem>>, vector<2x1x32xf32>
    %6 = vector.shape_cast %5 : vector<2x1x32xf32> to vector<2x32xf32>
    %c0_7 = arith.constant 0 : index
    %c0_8 = arith.constant 0 : index
    %7 = vector.load %arg4[%c0_7, %c0_8] : memref<32x96xf32, #tpu.memory_space<vmem>>, vector<32x96xf32>
    %cst_9 = arith.constant dense<0.000000e+00> : vector<16x96xf32>
    %8 = tpu.matmul %4, %7, %cst_9 {dimension_numbers = #tpu.dot_dimension_numbers<[1], [0], [0], [1], [0, 0, 1, 1], [], []>} : vector<16x32xf32>, vector<32x96xf32>, vector<16x96xf32> -> vector<16x96xf32>
    %c2_i32 = arith.constant 2 : i32
    %9 = arith.muli %arg0, %c2_i32 : i32
    %10 = tpu.iota {dimensions = array<i32: 0>} : vector<2x8xi32>
    %11 = tpu.iota {dimensions = array<i32: 1>} : vector<2x8xi32>
    %c0_i32 = arith.constant 0 : i32
    %12 = vector.broadcast %c0_i32 : i32 to vector<2x8xi32>
    %c0_i32_10 = arith.constant 0 : i32
    %13 = vector.broadcast %c0_i32_10 : i32 to vector<2x8xi32>
    %14 = arith.cmpi eq, %10, %13 : vector<2x8xi32>
    %c0_i32_11 = arith.constant 0 : i32
    %15 = arith.addi %9, %c0_i32_11 : i32
    %16 = arith.index_cast %15 : i32 to index
    %17 = memref.load %arg1[%16] : memref<2xi32, #tpu.memory_space<smem>>
    %18 = vector.broadcast %17 : i32 to vector<2x8xi32>
    %19 = arith.select %14, %18, %12 : vector<2x8xi1>, vector<2x8xi32>
    %c1_i32 = arith.constant 1 : i32
    %20 = vector.broadcast %c1_i32 : i32 to vector<2x8xi32>
    %21 = arith.cmpi eq, %10, %20 : vector<2x8xi32>
    %c1_i32_12 = arith.constant 1 : i32
    %22 = arith.addi %9, %c1_i32_12 : i32
    %23 = arith.index_cast %22 : i32 to index
    %24 = memref.load %arg1[%23] : memref<2xi32, #tpu.memory_space<smem>>
    %25 = vector.broadcast %24 : i32 to vector<2x8xi32>
    %26 = arith.select %21, %25, %19 : vector<2x8xi1>, vector<2x8xi32>
    %27 = arith.cmpi slt, %11, %26 : vector<2x8xi32>
    %28 = vector.extract_strided_slice %8 {offsets = [0, 0], sizes = [16, 32], strides = [1, 1]} : vector<16x96xf32> to vector<16x32xf32>
    %c0_13 = arith.constant 0 : index
    %c0_14 = arith.constant 0 : index
    %c0_15 = arith.constant 0 : index
    %29 = vector.load %arg5[%c0_13, %c0_14, %c0_15] : memref<3x32x32xf32, #tpu.memory_space<vmem>>, vector<1x32x32xf32>
    %30 = vector.shape_cast %29 : vector<1x32x32xf32> to vector<32x32xf32>
    %cst_16 = arith.constant dense<0.000000e+00> : vector<2x32xf32>
    %31 = tpu.matmul %6, %30, %cst_16 {dimension_numbers = #tpu.dot_dimension_numbers<[1], [0], [0], [1], [0, 0, 1, 1], [], []>} : vector<2x32xf32>, vector<32x32xf32>, vector<2x32xf32> -> vector<2x32xf32>
    %32 = vector.shape_cast %28 : vector<16x32xf32> to vector<2x8x32xf32>
    %33 = vector.shape_cast %31 : vector<2x32xf32> to vector<2x1x32xf32>
    %34 = vector.broadcast %33 : vector<2x1x32xf32> to vector<2x8x32xf32>
    %35 = arith.addf %32, %34 : vector<2x8x32xf32>
    %36 = math.tanh %35 : vector<2x8x32xf32>
    %37 = vector.shape_cast %36 : vector<2x8x32xf32> to vector<16x32xf32>
    %c0_17 = arith.constant 0 : index
    %c0_18 = arith.constant 0 : index
    %c0_19 = arith.constant 0 : index
    %38 = vector.load %arg6[%c0_17, %c0_18, %c0_19] : memref<3x32x16xf32, #tpu.memory_space<vmem>>, vector<1x32x16xf32>
    %39 = vector.shape_cast %38 : vector<1x32x16xf32> to vector<32x16xf32>
    %cst_20 = arith.constant dense<0.000000e+00> : vector<16x16xf32>
    %40 = tpu.matmul %37, %39, %cst_20 {dimension_numbers = #tpu.dot_dimension_numbers<[1], [0], [0], [1], [0, 0, 1, 1], [], []>} : vector<16x32xf32>, vector<32x16xf32>, vector<16x16xf32> -> vector<16x16xf32>
    %41 = math.tanh %40 : vector<16x16xf32>
    %42 = vector.shape_cast %41 : vector<16x16xf32> to vector<2x8x16xf32>
    %c0_21 = arith.constant 0 : index
    %c0_22 = arith.constant 0 : index
    %c0_23 = arith.constant 0 : index
    %43 = vector.load %arg7[%c0_21, %c0_22, %c0_23] : memref<3x1x16xf32, #tpu.memory_space<vmem>>, vector<1x1x16xf32>
    %44 = vector.shape_cast %43 : vector<1x1x16xf32> to vector<1x16xf32>
    %45 = vector.shape_cast %44 : vector<1x16xf32> to vector<1x1x16xf32>
    %46 = vector.broadcast %45 : vector<1x1x16xf32> to vector<2x8x16xf32>
    %47 = arith.mulf %42, %46 : vector<2x8x16xf32>
    %cst_24 = arith.constant dense<0.000000e+00> : vector<2x8xf32>
    %48 = vector.multi_reduction <add>, %47, %cst_24 [2] : vector<2x8x16xf32> to vector<2x8xf32>
    %cst_25 = arith.constant -1.000000e+32 : f32
    %49 = vector.broadcast %cst_25 : f32 to vector<2x8xf32>
    %50 = arith.select %27, %48, %49 : vector<2x8xi1>, vector<2x8xf32>
    %cst_26 = arith.constant dense<0xFF800000> : vector<2xf32>
    %51 = vector.multi_reduction <maximumf>, %50, %cst_26 [1] : vector<2x8xf32> to vector<2xf32>
    %52 = vector.shape_cast %51 : vector<2xf32> to vector<2x1xf32>
    %53 = vector.broadcast %52 : vector<2x1xf32> to vector<2x8xf32>
    %54 = arith.subf %50, %53 : vector<2x8xf32>
    %55 = math.exp %54 : vector<2x8xf32>
    %cst_27 = arith.constant dense<0.000000e+00> : vector<2xf32>
    %56 = vector.multi_reduction <add>, %55, %cst_27 [1] : vector<2x8xf32> to vector<2xf32>
    %57 = vector.shape_cast %56 : vector<2xf32> to vector<2x1xf32>
    %58 = vector.broadcast %57 : vector<2x1xf32> to vector<2x8xf32>
    %59 = arith.divf %55, %58 : vector<2x8xf32>
    %60 = vector.shape_cast %59 : vector<2x8xf32> to vector<2x8x1xf32>
    %61 = vector.broadcast %60 : vector<2x8x1xf32> to vector<2x8x32xf32>
    %62 = arith.mulf %61, %3 : vector<2x8x32xf32>
    %cst_28 = arith.constant dense<0.000000e+00> : vector<2x32xf32>
    %63 = vector.multi_reduction <add>, %62, %cst_28 [1] : vector<2x8x32xf32> to vector<2x32xf32>
    %64 = arith.addf %6, %63 : vector<2x32xf32>
    %65 = vector.extract_strided_slice %8 {offsets = [0, 32], sizes = [16, 32], strides = [1, 1]} : vector<16x96xf32> to vector<16x32xf32>
    %c1 = arith.constant 1 : index
    %c0_29 = arith.constant 0 : index
    %c0_30 = arith.constant 0 : index
    %66 = vector.load %arg5[%c1, %c0_29, %c0_30] : memref<3x32x32xf32, #tpu.memory_space<vmem>>, vector<1x32x32xf32>
    %67 = vector.shape_cast %66 : vector<1x32x32xf32> to vector<32x32xf32>
    %cst_31 = arith.constant dense<0.000000e+00> : vector<2x32xf32>
    %68 = tpu.matmul %64, %67, %cst_31 {dimension_numbers = #tpu.dot_dimension_numbers<[1], [0], [0], [1], [0, 0, 1, 1], [], []>} : vector<2x32xf32>, vector<32x32xf32>, vector<2x32xf32> -> vector<2x32xf32>
    %69 = vector.shape_cast %65 : vector<16x32xf32> to vector<2x8x32xf32>
    %70 = vector.shape_cast %68 : vector<2x32xf32> to vector<2x1x32xf32>
    %71 = vector.broadcast %70 : vector<2x1x32xf32> to vector<2x8x32xf32>
    %72 = arith.addf %69, %71 : vector<2x8x32xf32>
    %73 = math.tanh %72 : vector<2x8x32xf32>
    %74 = vector.shape_cast %73 : vector<2x8x32xf32> to vector<16x32xf32>
    %c1_32 = arith.constant 1 : index
    %c0_33 = arith.constant 0 : index
    %c0_34 = arith.constant 0 : index
    %75 = vector.load %arg6[%c1_32, %c0_33, %c0_34] : memref<3x32x16xf32, #tpu.memory_space<vmem>>, vector<1x32x16xf32>
    %76 = vector.shape_cast %75 : vector<1x32x16xf32> to vector<32x16xf32>
    %cst_35 = arith.constant dense<0.000000e+00> : vector<16x16xf32>
    %77 = tpu.matmul %74, %76, %cst_35 {dimension_numbers = #tpu.dot_dimension_numbers<[1], [0], [0], [1], [0, 0, 1, 1], [], []>} : vector<16x32xf32>, vector<32x16xf32>, vector<16x16xf32> -> vector<16x16xf32>
    %78 = math.tanh %77 : vector<16x16xf32>
    %79 = vector.shape_cast %78 : vector<16x16xf32> to vector<2x8x16xf32>
    %c1_36 = arith.constant 1 : index
    %c0_37 = arith.constant 0 : index
    %c0_38 = arith.constant 0 : index
    %80 = vector.load %arg7[%c1_36, %c0_37, %c0_38] : memref<3x1x16xf32, #tpu.memory_space<vmem>>, vector<1x1x16xf32>
    %81 = vector.shape_cast %80 : vector<1x1x16xf32> to vector<1x16xf32>
    %82 = vector.shape_cast %81 : vector<1x16xf32> to vector<1x1x16xf32>
    %83 = vector.broadcast %82 : vector<1x1x16xf32> to vector<2x8x16xf32>
    %84 = arith.mulf %79, %83 : vector<2x8x16xf32>
    %cst_39 = arith.constant dense<0.000000e+00> : vector<2x8xf32>
    %85 = vector.multi_reduction <add>, %84, %cst_39 [2] : vector<2x8x16xf32> to vector<2x8xf32>
    %cst_40 = arith.constant -1.000000e+32 : f32
    %86 = vector.broadcast %cst_40 : f32 to vector<2x8xf32>
    %87 = arith.select %27, %85, %86 : vector<2x8xi1>, vector<2x8xf32>
    %cst_41 = arith.constant dense<0xFF800000> : vector<2xf32>
    %88 = vector.multi_reduction <maximumf>, %87, %cst_41 [1] : vector<2x8xf32> to vector<2xf32>
    %89 = vector.shape_cast %88 : vector<2xf32> to vector<2x1xf32>
    %90 = vector.broadcast %89 : vector<2x1xf32> to vector<2x8xf32>
    %91 = arith.subf %87, %90 : vector<2x8xf32>
    %92 = math.exp %91 : vector<2x8xf32>
    %cst_42 = arith.constant dense<0.000000e+00> : vector<2xf32>
    %93 = vector.multi_reduction <add>, %92, %cst_42 [1] : vector<2x8xf32> to vector<2xf32>
    %94 = vector.shape_cast %93 : vector<2xf32> to vector<2x1xf32>
    %95 = vector.broadcast %94 : vector<2x1xf32> to vector<2x8xf32>
    %96 = arith.divf %92, %95 : vector<2x8xf32>
    %97 = vector.shape_cast %96 : vector<2x8xf32> to vector<2x8x1xf32>
    %98 = vector.broadcast %97 : vector<2x8x1xf32> to vector<2x8x32xf32>
    %99 = arith.mulf %98, %3 : vector<2x8x32xf32>
    %cst_43 = arith.constant dense<0.000000e+00> : vector<2x32xf32>
    %100 = vector.multi_reduction <add>, %99, %cst_43 [1] : vector<2x8x32xf32> to vector<2x32xf32>
    %101 = arith.addf %64, %100 : vector<2x32xf32>
    %102 = vector.extract_strided_slice %8 {offsets = [0, 64], sizes = [16, 32], strides = [1, 1]} : vector<16x96xf32> to vector<16x32xf32>
    %c2 = arith.constant 2 : index
    %c0_44 = arith.constant 0 : index
    %c0_45 = arith.constant 0 : index
    %103 = vector.load %arg5[%c2, %c0_44, %c0_45] : memref<3x32x32xf32, #tpu.memory_space<vmem>>, vector<1x32x32xf32>
    %104 = vector.shape_cast %103 : vector<1x32x32xf32> to vector<32x32xf32>
    %cst_46 = arith.constant dense<0.000000e+00> : vector<2x32xf32>
    %105 = tpu.matmul %101, %104, %cst_46 {dimension_numbers = #tpu.dot_dimension_numbers<[1], [0], [0], [1], [0, 0, 1, 1], [], []>} : vector<2x32xf32>, vector<32x32xf32>, vector<2x32xf32> -> vector<2x32xf32>
    %106 = vector.shape_cast %102 : vector<16x32xf32> to vector<2x8x32xf32>
    %107 = vector.shape_cast %105 : vector<2x32xf32> to vector<2x1x32xf32>
    %108 = vector.broadcast %107 : vector<2x1x32xf32> to vector<2x8x32xf32>
    %109 = arith.addf %106, %108 : vector<2x8x32xf32>
    %110 = math.tanh %109 : vector<2x8x32xf32>
    %111 = vector.shape_cast %110 : vector<2x8x32xf32> to vector<16x32xf32>
    %c2_47 = arith.constant 2 : index
    %c0_48 = arith.constant 0 : index
    %c0_49 = arith.constant 0 : index
    %112 = vector.load %arg6[%c2_47, %c0_48, %c0_49] : memref<3x32x16xf32, #tpu.memory_space<vmem>>, vector<1x32x16xf32>
    %113 = vector.shape_cast %112 : vector<1x32x16xf32> to vector<32x16xf32>
    %cst_50 = arith.constant dense<0.000000e+00> : vector<16x16xf32>
    %114 = tpu.matmul %111, %113, %cst_50 {dimension_numbers = #tpu.dot_dimension_numbers<[1], [0], [0], [1], [0, 0, 1, 1], [], []>} : vector<16x32xf32>, vector<32x16xf32>, vector<16x16xf32> -> vector<16x16xf32>
    %115 = math.tanh %114 : vector<16x16xf32>
    %116 = vector.shape_cast %115 : vector<16x16xf32> to vector<2x8x16xf32>
    %c2_51 = arith.constant 2 : index
    %c0_52 = arith.constant 0 : index
    %c0_53 = arith.constant 0 : index
    %117 = vector.load %arg7[%c2_51, %c0_52, %c0_53] : memref<3x1x16xf32, #tpu.memory_space<vmem>>, vector<1x1x16xf32>
    %118 = vector.shape_cast %117 : vector<1x1x16xf32> to vector<1x16xf32>
    %119 = vector.shape_cast %118 : vector<1x16xf32> to vector<1x1x16xf32>
    %120 = vector.broadcast %119 : vector<1x1x16xf32> to vector<2x8x16xf32>
    %121 = arith.mulf %116, %120 : vector<2x8x16xf32>
    %cst_54 = arith.constant dense<0.000000e+00> : vector<2x8xf32>
    %122 = vector.multi_reduction <add>, %121, %cst_54 [2] : vector<2x8x16xf32> to vector<2x8xf32>
    %cst_55 = arith.constant -1.000000e+32 : f32
    %123 = vector.broadcast %cst_55 : f32 to vector<2x8xf32>
    %124 = arith.select %27, %122, %123 : vector<2x8xi1>, vector<2x8xf32>
    %cst_56 = arith.constant dense<0xFF800000> : vector<2xf32>
    %125 = vector.multi_reduction <maximumf>, %124, %cst_56 [1] : vector<2x8xf32> to vector<2xf32>
    %126 = vector.shape_cast %125 : vector<2xf32> to vector<2x1xf32>
    %127 = vector.broadcast %126 : vector<2x1xf32> to vector<2x8xf32>
    %128 = arith.subf %124, %127 : vector<2x8xf32>
    %129 = math.exp %128 : vector<2x8xf32>
    %cst_57 = arith.constant dense<0.000000e+00> : vector<2xf32>
    %130 = vector.multi_reduction <add>, %129, %cst_57 [1] : vector<2x8xf32> to vector<2xf32>
    %131 = vector.shape_cast %130 : vector<2xf32> to vector<2x1xf32>
    %132 = vector.broadcast %131 : vector<2x1xf32> to vector<2x8xf32>
    %133 = arith.divf %129, %132 : vector<2x8xf32>
    %134 = vector.shape_cast %133 : vector<2x8xf32> to vector<2x8x1xf32>
    %135 = vector.broadcast %134 : vector<2x8x1xf32> to vector<2x8x32xf32>
    %136 = arith.mulf %135, %3 : vector<2x8x32xf32>
    %cst_58 = arith.constant dense<0.000000e+00> : vector<2x32xf32>
    %137 = vector.multi_reduction <add>, %136, %cst_58 [1] : vector<2x8x32xf32> to vector<2x32xf32>
    %138 = vector.shape_cast %137 : vector<2x32xf32> to vector<2x1x32xf32>
    %c0_59 = arith.constant 0 : index
    %c0_60 = arith.constant 0 : index
    %c0_61 = arith.constant 0 : index
    %139 = vector.load %arg8[%c0_59, %c0_60, %c0_61] : memref<2x1x32xf32, #tpu.memory_space<vmem>>, vector<2x1x32xf32>
    tpu.vector_store %arg8[%c0_59, %c0_60, %c0_61], %138 {strides = array<i32>} : memref<2x1x32xf32, #tpu.memory_space<vmem>>, vector<2x1x32xf32>,
    return
  }
  func.func @transform_0(%arg0: i32, %arg1: memref<2xi32, #tpu.memory_space<smem>>) -> (i32, i32, i32, i32) {
    %c0_i32 = arith.constant 0 : i32
    %c0_i32_0 = arith.constant 0 : i32
    %c0_i32_1 = arith.constant 0 : i32
    %c0_i32_2 = arith.constant 0 : i32
    return %arg0, %c0_i32, %c0_i32_0, %c0_i32_1 : i32, i32, i32, i32
  }
  func.func @transform_1(%arg0: i32, %arg1: memref<2xi32, #tpu.memory_space<smem>>) -> (i32, i32, i32) {
    %c0_i32 = arith.constant 0 : i32
    %c0_i32_0 = arith.constant 0 : i32
    %c0_i32_1 = arith.constant 0 : i32
    return %arg0, %c0_i32, %c0_i32_0 : i32, i32, i32
  }
  func.func @transform_2(%arg0: i32, %arg1: memref<2xi32, #tpu.memory_space<smem>>) -> (i32, i32) {
    %c0_i32 = arith.constant 0 : i32
    %c0_i32_0 = arith.constant 0 : i32
    %c0_i32_1 = arith.constant 0 : i32
    return %c0_i32, %c0_i32_0 : i32, i32
  }
  func.func @transform_3(%arg0: i32, %arg1: memref<2xi32, #tpu.memory_space<smem>>) -> (i32, i32, i32) {
    %c0_i32 = arith.constant 0 : i32
    %c0_i32_0 = arith.constant 0 : i32
    %c0_i32_1 = arith.constant 0 : i32
    %c0_i32_2 = arith.constant 0 : i32
    return %c0_i32, %c0_i32_0, %c0_i32_1 : i32, i32, i32
  }
  func.func @transform_4(%arg0: i32, %arg1: memref<2xi32, #tpu.memory_space<smem>>) -> (i32, i32, i32) {
    %c0_i32 = arith.constant 0 : i32
    %c0_i32_0 = arith.constant 0 : i32
    %c0_i32_1 = arith.constant 0 : i32
    %c0_i32_2 = arith.constant 0 : i32
    return %c0_i32, %c0_i32_0, %c0_i32_1 : i32, i32, i32
  }
  func.func @transform_5(%arg0: i32, %arg1: memref<2xi32, #tpu.memory_space<smem>>) -> (i32, i32, i32) {
    %c0_i32 = arith.constant 0 : i32
    %c0_i32_0 = arith.constant 0 : i32
    %c0_i32_1 = arith.constant 0 : i32
    %c0_i32_2 = arith.constant 0 : i32
    return %c0_i32, %c0_i32_0, %c0_i32_1 : i32, i32, i32
  }
  func.func @transform_6(%arg0: i32, %arg1: memref<2xi32, #tpu.memory_space<smem>>) -> (i32, i32, i32) {
    %c0_i32 = arith.constant 0 : i32
    %c0_i32_0 = arith.constant 0 : i32
    %c0_i32_1 = arith.constant 0 : i32
    return %arg0, %c0_i32, %c0_i32_0 : i32, i32, i32
  }
}

module attributes {stable_mosaic.version = 11 : i64} {
  func.func @memory_kernel(%arg0: i32, %arg1: memref<2xi32, #tpu.memory_space<smem>>, %arg2: memref<2x8x5x32xf32, #tpu.memory_space<vmem>>, %arg3: memref<2x1x32xf32, #tpu.memory_space<vmem>>, %arg4: memref<32x96xf32, #tpu.memory_space<vmem>>, %arg5: memref<3x32x32xf32, #tpu.memory_space<vmem>>, %arg6: memref<3x32x16xf32, #tpu.memory_space<vmem>>, %arg7: memref<3x1x16xf32, #tpu.memory_space<vmem>>, %arg8: memref<2x1x32xf32, #tpu.memory_space<vmem>>) attributes {dimension_semantics = [#tpu.dimension_semantics<parallel>], iteration_bounds = array<i64: 1>, scalar_prefetch = 1 : i64, scratch_operands = 0 : i64, tpu.core_type = #tpu.core_type<tc>, window_params = [{transform_indices = @transform_0, window_bounds = array<i64: 2, 8, 5, 32>}, {transform_indices = @transform_1, window_bounds = array<i64: 2, 1, 32>}, {pipeline_mode = #tpu.pipeline_mode<synchronous>, transform_indices = @transform_2, window_bounds = array<i64: 32, 96>}, {pipeline_mode = #tpu.pipeline_mode<synchronous>, transform_indices = @transform_3, window_bounds = array<i64: 3, 32, 32>}, {pipeline_mode = #tpu.pipeline_mode<synchronous>, transform_indices = @transform_4, window_bounds = array<i64: 3, 32, 16>}, {pipeline_mode = #tpu.pipeline_mode<synchronous>, transform_indices = @transform_5, window_bounds = array<i64: 3, 1, 16>}, {transform_indices = @transform_6, window_bounds = array<i64: 2, 1, 32>}]} {
    %c0 = arith.constant 0 : index
    %c0_0 = arith.constant 0 : index
    %c0_1 = arith.constant 0 : index
    %c0_2 = arith.constant 0 : index
    %0 = vector.load %arg2[%c0, %c0_0, %c0_1, %c0_2] : memref<2x8x5x32xf32, #tpu.memory_space<vmem>>, vector<2x8x5x32xf32>
    %cst = arith.constant dense<0.000000e+00> : vector<2x8x32xf32>
    %1 = vector.multi_reduction <add>, %0, %cst [2] : vector<2x8x5x32xf32> to vector<2x8x32xf32>
    %cst_3 = arith.constant 5.000000e+00 : f32
    %2 = vector.broadcast %cst_3 : f32 to vector<2x8x32xf32>
    %3 = arith.divf %1, %2 : vector<2x8x32xf32>
    %4 = vector.shape_cast %3 : vector<2x8x32xf32> to vector<16x32xf32>
    %c0_4 = arith.constant 0 : index
    %c0_5 = arith.constant 0 : index
    %c0_6 = arith.constant 0 : index
    %5 = vector.load %arg3[%c0_4, %c0_5, %c0_6] : memref<2x1x32xf32, #tpu.memory_space<vmem>>, vector<2x1x32xf32>
    %6 = vector.shape_cast %5 : vector<2x1x32xf32> to vector<2x32xf32>
    %c0_7 = arith.constant 0 : index
    %c0_8 = arith.constant 0 : index
    %7 = vector.load %arg4[%c0_7, %c0_8] : memref<32x96xf32, #tpu.memory_space<vmem>>, vector<32x96xf32>
    %cst_9 = arith.constant dense<0.000000e+00> : vector<16x96xf32>
    %8 = tpu.matmul %4, %7, %cst_9 {dimension_numbers = #tpu.dot_dimension_numbers<[1], [0], [0], [1], [0, 0, 1, 1], [], []>} : vector<16x32xf32>, vector<32x96xf32>, vector<16x96xf32> -> vector<16x96xf32>
    %c2_i32 = arith.constant 2 : i32
    %9 = arith.muli %arg0, %c2_i32 : i32
    %10 = tpu.iota {dimensions = array<i32: 0>} : vector<2x8xi32>
    %11 = tpu.iota {dimensions = array<i32: 1>} : vector<2x8xi32>
    %c0_i32 = arith.constant 0 : i32
    %12 = vector.broadcast %c0_i32 : i32 to vector<2x8xi32>
    %c0_i32_10 = arith.constant 0 : i32
    %13 = vector.broadcast %c0_i32_10 : i32 to vector<2x8xi32>
    %14 = arith.cmpi eq, %10, %13 : vector<2x8xi32>
    %c0_i32_11 = arith.constant 0 : i32
    %15 = arith.addi %9, %c0_i32_11 : i32
    %16 = arith.index_cast %15 : i32 to index
    %17 = memref.load %arg1[%16] : memref<2xi32, #tpu.memory_space<smem>>
    %18 = vector.broadcast %17 : i32 to vector<2x8xi32>
    %19 = arith.select %14, %18, %12 : vector<2x8xi1>, vector<2x8xi32>
    %c1_i32 = arith.constant 1 : i32
    %20 = vector.broadcast %c1_i32 : i32 to vector<2x8xi32>
    %21 = arith.cmpi eq, %10, %20 : vector<2x8xi32>
    %c1_i32_12 = arith.constant 1 : i32
    %22 = arith.addi %9, %c1_i32_12 : i32
    %23 = arith.index_cast %22 : i32 to index
    %24 = memref.load %arg1[%23] : memref<2xi32, #tpu.memory_space<smem>>
    %25 = vector.broadcast %24 : i32 to vector<2x8xi32>
    %26 = arith.select %21, %25, %19 : vector<2x8xi1>, vector<2x8xi32>
    %27 = arith.cmpi slt, %11, %26 : vector<2x8xi32>
    %28 = vector.extract_strided_slice %8 {offsets = [0, 0], sizes = [16, 32], strides = [1, 1]} : vector<16x96xf32> to vector<16x32xf32>
    %c0_13 = arith.constant 0 : index
    %c0_14 = arith.constant 0 : index
    %c0_15 = arith.constant 0 : index
    %29 = vector.load %arg5[%c0_13, %c0_14, %c0_15] : memref<3x32x32xf32, #tpu.memory_space<vmem>>, vector<1x32x32xf32>
    %30 = vector.shape_cast %29 : vector<1x32x32xf32> to vector<32x32xf32>
    %cst_16 = arith.constant dense<0.000000e+00> : vector<2x32xf32>
    %31 = tpu.matmul %6, %30, %cst_16 {dimension_numbers = #tpu.dot_dimension_numbers<[1], [0], [0], [1], [0, 0, 1, 1], [], []>} : vector<2x32xf32>, vector<32x32xf32>, vector<2x32xf32> -> vector<2x32xf32>
    %32 = vector.shape_cast %28 : vector<16x32xf32> to vector<2x8x32xf32>
    %33 = vector.shape_cast %31 : vector<2x32xf32> to vector<2x1x32xf32>
    %34 = vector.broadcast %33 : vector<2x1x32xf32> to vector<2x8x32xf32>
    %35 = arith.addf %32, %34 : vector<2x8x32xf32>
    %36 = math.tanh %35 : vector<2x8x32xf32>
    %37 = vector.shape_cast %36 : vector<2x8x32xf32> to vector<16x32xf32>
    %c0_17 = arith.constant 0 : index
    %c0_18 = arith.constant 0 : index
    %c0_19 = arith.constant 0 : index
    %38 = vector.load %arg6[%c0_17, %c0_18, %c0_19] : memref<3x32x16xf32, #tpu.memory_space<vmem>>, vector<1x32x16xf32>
    %39 = vector.shape_cast %38 : vector<1x32x16xf32> to vector<32x16xf32>
    %cst_20 = arith.constant dense<0.000000e+00> : vector<16x16xf32>
    %40 = tpu.matmul %37, %39, %cst_20 {dimension_numbers = #tpu.dot_dimension_numbers<[1], [0], [0], [1], [0, 0, 1, 1], [], []>} : vector<16x32xf32>, vector<32x16xf32>, vector<16x16xf32> -> vector<16x16xf32>
    %41 = math.tanh %40 : vector<16x16xf32>
    %42 = vector.shape_cast %41 : vector<16x16xf32> to vector<2x8x16xf32>
    %c0_21 = arith.constant 0 : index
    %c0_22 = arith.constant 0 : index
    %c0_23 = arith.constant 0 : index
    %43 = vector.load %arg7[%c0_21, %c0_22, %c0_23] : memref<3x1x16xf32, #tpu.memory_space<vmem>>, vector<1x1x16xf32>
    %44 = vector.shape_cast %43 : vector<1x1x16xf32> to vector<1x16xf32>
    %45 = vector.shape_cast %44 : vector<1x16xf32> to vector<1x1x16xf32>
    %46 = vector.broadcast %45 : vector<1x1x16xf32> to vector<2x8x16xf32>
    %47 = arith.mulf %42, %46 : vector<2x8x16xf32>
    %cst_24 = arith.constant dense<0.000000e+00> : vector<2x8xf32>
    %48 = vector.multi_reduction <add>, %47, %cst_24 [2] : vector<2x8x16xf32> to vector<2x8xf32>
    %cst_25 = arith.constant -1.000000e+32 : f32
    %49 = vector.broadcast %cst_25 : f32 to vector<2x8xf32>
    %50 = arith.select %27, %48, %49 : vector<2x8xi1>, vector<2x8xf32>
    %cst_26 = arith.constant dense<0xFF800000> : vector<2xf32>
    %51 = vector.multi_reduction <maximumf>, %50, %cst_26 [1] : vector<2x8xf32> to vector<2xf32>
    %52 = vector.shape_cast %51 : vector<2xf32> to vector<2x1xf32>
    %53 = vector.broadcast %52 : vector<2x1xf32> to vector<2x8xf32>
    %54 = arith.subf %50, %53 : vector<2x8xf32>
    %55 = math.exp %54 : vector<2x8xf32>
    %cst_27 = arith.constant dense<0.000000e+00> : vector<2xf32>
    %56 = vector.multi_reduction <add>, %55, %cst_27 [1] : vector<2x8xf32> to vector<2xf32>
    %57 = vector.shape_cast %56 : vector<2xf32> to vector<2x1xf32>
    %58 = vector.broadcast %57 : vector<2x1xf32> to vector<2x8xf32>
    %59 = arith.divf %55, %58 : vector<2x8xf32>
    %60 = vector.shape_cast %59 : vector<2x8xf32> to vector<2x8x1xf32>
    %61 = vector.broadcast %60 : vector<2x8x1xf32> to vector<2x8x32xf32>
    %62 = arith.mulf %61, %3 : vector<2x8x32xf32>
    %cst_28 = arith.constant dense<0.000000e+00> : vector<2x32xf32>
    %63 = vector.multi_reduction <add>, %62, %cst_28 [1] : vector<2x8x32xf32> to vector<2x32xf32>
    %64 = arith.addf %6, %63 : vector<2x32xf32>
    %65 = vector.extract_strided_slice %8 {offsets = [0, 32], sizes = [16, 32], strides = [1, 1]} : vector<16x96xf32> to vector<16x32xf32>
    %c1 = arith.constant 1 : index
    %c0_29 = arith.constant 0 : index
    %c0_30 = arith.constant 0 : index
    %66 = vector.load %arg5[%c1, %c0_29, %c0_30] : memref<3x32x32xf32, #tpu.memory_space<vmem>>, vector<1x32x32xf32>
    %67 = vector.shape_cast %66 : vector<1x32x32xf32> to vector<32x32xf32>
    %cst_31 = arith.constant dense<0.000000e+00> : vector<2x32xf32>
    %68 = tpu.matmul %64, %67, %cst_31 {dimension_numbers = #tpu.dot_dimension_numbers<[1], [0], [0], [1], [0, 0, 1, 1], [], []>} : vector<2x32xf32>, vector<32x32xf32>, vector<2x32xf32> -> vector<2x32xf32>
    %69 = vector.shape_cast %65 : vector<16x32xf32> to vector<2x8x32xf32>
    %70 = vector.shape_cast %68 : vector<2x32xf32> to vector<2x1x32xf32>
    %71 = vector.broadcast %70 : vector<2x1x32xf32> to vector<2x8x32xf32>
    %72 = arith.addf %69, %71 : vector<2x8x32xf32>
    %73 = math.tanh %72 : vector<2x8x32xf32>
    %74 = vector.shape_cast %73 : vector<2x8x32xf32> to vector<16x32xf32>
    %c1_32 = arith.constant 1 : index
    %c0_33 = arith.constant 0 : index
    %c0_34 = arith.constant 0 : index
    %75 = vector.load %arg6[%c1_32, %c0_33, %c0_34] : memref<3x32x16xf32, #tpu.memory_space<vmem>>, vector<1x32x16xf32>
    %76 = vector.shape_cast %75 : vector<1x32x16xf32> to vector<32x16xf32>
    %cst_35 = arith.constant dense<0.000000e+00> : vector<16x16xf32>
    %77 = tpu.matmul %74, %76, %cst_35 {dimension_numbers = #tpu.dot_dimension_numbers<[1], [0], [0], [1], [0, 0, 1, 1], [], []>} : vector<16x32xf32>, vector<32x16xf32>, vector<16x16xf32> -> vector<16x16xf32>
    %78 = math.tanh %77 : vector<16x16xf32>
    %79 = vector.shape_cast %78 : vector<16x16xf32> to vector<2x8x16xf32>
    %c1_36 = arith.constant 1 : index
    %c0_37 = arith.constant 0 : index
    %c0_38 = arith.constant 0 : index
    %80 = vector.load %arg7[%c1_36, %c0_37, %c0_38] : memref<3x1x16xf32, #tpu.memory_space<vmem>>, vector<1x1x16xf32>
    %81 = vector.shape_cast %80 : vector<1x1x16xf32> to vector<1x16xf32>
    %82 = vector.shape_cast %81 : vector<1x16xf32> to vector<1x1x16xf32>
    %83 = vector.broadcast %82 : vector<1x1x16xf32> to vector<2x8x16xf32>
    %84 = arith.mulf %79, %83 : vector<2x8x16xf32>
    %cst_39 = arith.constant dense<0.000000e+00> : vector<2x8xf32>
    %85 = vector.multi_reduction <add>, %84, %cst_39 [2] : vector<2x8x16xf32> to vector<2x8xf32>
    %cst_40 = arith.constant -1.000000e+32 : f32
    %86 = vector.broadcast %cst_40 : f32 to vector<2x8xf32>
    %87 = arith.select %27, %85, %86 : vector<2x8xi1>, vector<2x8xf32>
    %cst_41 = arith.constant dense<0xFF800000> : vector<2xf32>
    %88 = vector.multi_reduction <maximumf>, %87, %cst_41 [1] : vector<2x8xf32> to vector<2xf32>
    %89 = vector.shape_cast %88 : vector<2xf32> to vector<2x1xf32>
    %90 = vector.broadcast %89 : vector<2x1xf32> to vector<2x8xf32>
    %91 = arith.subf %87, %90 : vector<2x8xf32>
    %92 = math.exp %91 : vector<2x8xf32>
    %cst_42 = arith.constant dense<0.000000e+00> : vector<2xf32>
    %93 = vector.multi_reduction <add>, %92, %cst_42 [1] : vector<2x8xf32> to vector<2xf32>
    %94 = vector.shape_cast %93 : vector<2xf32> to vector<2x1xf32>
    %95 = vector.broadcast %94 : vector<2x1xf32> to vector<2x8xf32>
    %96 = arith.divf %92, %95 : vector<2x8xf32>
    %97 = vector.shape_cast %96 : vector<2x8xf32> to vector<2x8x1xf32>
    %98 = vector.broadcast %97 : vector<2x8x1xf32> to vector<2x8x32xf32>
    %99 = arith.mulf %98, %3 : vector<2x8x32xf32>
    %cst_43 = arith.constant dense<0.000000e+00> : vector<2x32xf32>
    %100 = vector.multi_reduction <add>, %99, %cst_43 [1] : vector<2x8x32xf32> to vector<2x32xf32>
    %101 = arith.addf %64, %100 : vector<2x32xf32>
    %102 = vector.extract_strided_slice %8 {offsets = [0, 64], sizes = [16, 32], strides = [1, 1]} : vector<16x96xf32> to vector<16x32xf32>
    %c2 = arith.constant 2 : index
    %c0_44 = arith.constant 0 : index
    %c0_45 = arith.constant 0 : index
    %103 = vector.load %arg5[%c2, %c0_44, %c0_45] : memref<3x32x32xf32, #tpu.memory_space<vmem>>, vector<1x32x32xf32>
    %104 = vector.shape_cast %103 : vector<1x32x32xf32> to vector<32x32xf32>
    %cst_46 = arith.constant dense<0.000000e+00> : vector<2x32xf32>
    %105 = tpu.matmul %101, %104, %cst_46 {dimension_numbers = #tpu.dot_dimension_numbers<[1], [0], [0], [1], [0, 0, 1, 1], [], []>} : vector<2x32xf32>, vector<32x32xf32>, vector<2x32xf32> -> vector<2x32xf32>
    %106 = vector.shape_cast %102 : vector<16x32xf32> to vector<2x8x32xf32>
    %107 = vector.shape_cast %105 : vector<2x32xf32> to vector<2x1x32xf32>
    %108 = vector.broadcast %107 : vector<2x1x32xf32> to vector<2x8x32xf32>
    %109 = arith.addf %106, %108 : vector<2x8x32xf32>
    %110 = math.tanh %109 : vector<2x8x32xf32>
    %111 = vector.shape_cast %110 : vector<2x8x32xf32> to vector<16x32xf32>
    %c2_47 = arith.constant 2 : index
    %c0_48 = arith.constant 0 : index
    %c0_49 = arith.constant 0 : index
    %112 = vector.load %arg6[%c2_47, %c0_48, %c0_49] : memref<3x32x16xf32, #tpu.memory_space<vmem>>, vector<1x32x16xf32>
    %113 = vector.shape_cast %112 : vector<1x32x16xf32> to vector<32x16xf32>
    %cst_50 = arith.constant dense<0.000000e+00> : vector<16x16xf32>
    %114 = tpu.matmul %111, %113, %cst_50 {dimension_numbers = #tpu.dot_dimension_numbers<[1], [0], [0], [1], [0, 0, 1, 1], [], []>} : vector<16x32xf32>, vector<32x16xf32>, vector<16x16xf32> -> vector<16x16xf32>
    %115 = math.tanh %114 : vector<16x16xf32>
    %116 = vector.shape_cast %115 : vector<16x16xf32> to vector<2x8x16xf32>
    %c2_51 = arith.constant 2 : index
    %c0_52 = arith.constant 0 : index
    %c0_53 = arith.constant 0 : index
    %117 = vector.load %arg7[%c2_51, %c0_52, %c0_53] : memref<3x1x16xf32, #tpu.memory_space<vmem>>, vector<1x1x16xf32>
    %118 = vector.shape_cast %117 : vector<1x1x16xf32> to vector<1x16xf32>
    %119 = vector.shape_cast %118 : vector<1x16xf32> to vector<1x1x16xf32>
    %120 = vector.broadcast %119 : vector<1x1x16xf32> to vector<2x8x16xf32>
    %121 = arith.mulf %116, %120 : vector<2x8x16xf32>
    %cst_54 = arith.constant dense<0.000000e+00> : vector<2x8xf32>
    %122 = vector.multi_reduction <add>, %121, %cst_54 [2] : vector<2x8x16xf32> to vector<2x8xf32>
    %cst_55 = arith.constant -1.000000e+32 : f32
    %123 = vector.broadcast %cst_55 : f32 to vector<2x8xf32>
    %124 = arith.select %27, %122, %123 : vector<2x8xi1>, vector<2x8xf32>
    %cst_56 = arith.constant dense<0xFF800000> : vector<2xf32>
    %125 = vector.multi_reduction <maximumf>, %124, %cst_56 [1] : vector<2x8xf32> to vector<2xf32>
    %126 = vector.shape_cast %125 : vector<2xf32> to vector<2x1xf32>
    %127 = vector.broadcast %126 : vector<2x1xf32> to vector<2x8xf32>
    %128 = arith.subf %124, %127 : vector<2x8xf32>
    %129 = math.exp %128 : vector<2x8xf32>
    %cst_57 = arith.constant dense<0.000000e+00> : vector<2xf32>
    %130 = vector.multi_reduction <add>, %129, %cst_57 [1] : vector<2x8xf32> to vector<2xf32>
    %131 = vector.shape_cast %130 : vector<2xf32> to vector<2x1xf32>
    %132 = vector.broadcast %131 : vector<2x1xf32> to vector<2x8xf32>
    %133 = arith.divf %129, %132 : vector<2x8xf32>
    %134 = vector.shape_cast %133 : vector<2x8xf32> to vector<2x8x1xf32>
    %135 = vector.broadcast %134 : vector<2x8x1xf32> to vector<2x8x32xf32>
    %136 = arith.mulf %135, %3 : vector<2x8x32xf32>
    %cst_58 = arith.constant dense<0.000000e+00> : vector<2x32xf32>
    %137 = vector.multi_reduction <add>, %136, %cst_58 [1] : vector<2x8x32xf32> to vector<2x32xf32>
    %138 = vector.shape_cast %137 : vector<2x32xf32> to vector<2x1x32xf32>
    %c0_59 = arith.constant 0 : index
    %c0_60 = arith.constant 0 : index
    %c0_61 = arith.constant 0 : index
    %139 = vector.load %arg8[%c0_59, %c0_60, %c0_61] : memref<2x1x32xf32, #tpu.memory_space<vmem>>, vector<2x1x32xf32>
    tpu.vector_store %arg8[%c0_59, %c0_60, %c0_61], %138 {strides = array<i32>} : memref<2x1x32xf32, #tpu.memory_space<vmem>>, vector<2x1x32xf32>,
    return
  }
  func.func @transform_0(%arg0: i32, %arg1: memref<2xi32, #tpu.memory_space<smem>>) -> (i32, i32, i32, i32) {
    %c0_i32 = arith.constant 0 : i32
    %c0_i32_0 = arith.constant 0 : i32
    %c0_i32_1 = arith.constant 0 : i32
    %c0_i32_2 = arith.constant 0 : i32
    return %arg0, %c0_i32, %c0_i32_0, %c0_i32_1 : i32, i32, i32, i32
  }
  func.func @transform_1(%arg0: i32, %arg1: memref<2xi32, #tpu.memory_space<smem>>) -> (i32, i32, i32) {
    %c0_i32 = arith.constant 0 : i32
    %c0_i32_0 = arith.constant 0 : i32
    %c0_i32_1 = arith.constant 0 : i32
    return %arg0, %c0_i32, %c0_i32_0 : i32, i32, i32
  }
  func.func @transform_2(%arg0: i32, %arg1: memref<2xi32, #tpu.memory_space<smem>>) -> (i32, i32) {
    %c0_i32 = arith.constant 0 : i32
    %c0_i32_0 = arith.constant 0 : i32
    %c0_i32_1 = arith.constant 0 : i32
    return %c0_i32, %c0_i32_0 : i32, i32
  }
  func.func @transform_3(%arg0: i32, %arg1: memref<2xi32, #tpu.memory_space<smem>>) -> (i32, i32, i32) {
    %c0_i32 = arith.constant 0 : i32
    %c0_i32_0 = arith.constant 0 : i32
    %c0_i32_1 = arith.constant 0 : i32
    %c0_i32_2 = arith.constant 0 : i32
    return %c0_i32, %c0_i32_0, %c0_i32_1 : i32, i32, i32
  }
  func.func @transform_4(%arg0: i32, %arg1: memref<2xi32, #tpu.memory_space<smem>>) -> (i32, i32, i32) {
    %c0_i32 = arith.constant 0 : i32
    %c0_i32_0 = arith.constant 0 : i32
    %c0_i32_1 = arith.constant 0 : i32
    %c0_i32_2 = arith.constant 0 : i32
    return %c0_i32, %c0_i32_0, %c0_i32_1 : i32, i32, i32
  }
  func.func @transform_5(%arg0: i32, %arg1: memref<2xi32, #tpu.memory_space<smem>>) -> (i32, i32, i32) {
    %c0_i32 = arith.constant 0 : i32
    %c0_i32_0 = arith.constant 0 : i32
    %c0_i32_1 = arith.constant 0 : i32
    %c0_i32_2 = arith.constant 0 : i32
    return %c0_i32, %c0_i32_0, %c0_i32_1 : i32, i32, i32
  }
  func.func @transform_6(%arg0: i32, %arg1: memref<2xi32, #tpu.memory_space<smem>>) -> (i32, i32, i32) {
    %c0_i32 = arith.constant 0 : i32
    %c0_i32_0 = arith.constant 0 : i32
    %c0_i32_1 = arith.constant 0 : i32
    return %arg0, %c0_i32, %c0_i32_0 : i32, i32, i32
  }
}

</mosaic_0001>

<llo_original>
// kernel: tpu_custom_call.1
$region0: #{tpu_custom_call.1}
  #allocation0 [shape = 'u32[]', space=smem, size = 0x4, offset = 0x4, fixed_abs, tag = 'smem constant byte address 0x4 - core index']
  #allocation1 [shape = 'u32[144,128]{1,0:T(1,128)}', space=vmem, size = 0x12000, scoped, tag = 'internal scratch']
  #allocation2 [shape = 's32[1]{0}', space=sflag, size = 0x4, scoped, tag = 'scoped memory for tpu_custom_call.1']
  #allocation3 [shape = 'u8[512]{0}', space=smem, size = 0x200, scoped, tag = 'prefetched SMEM operand 0']
  %s0 = inlined_call_operand.vmem [shape: s32[2], index: 0, kind: input, shape index: {}]
  %s1 = inlined_call_operand.vmem [shape: f32[2,8,5,32], index: 1, kind: input, shape index: {}]
  %s2 = inlined_call_operand.vmem [shape: f32[2,1,32], index: 2, kind: input, shape index: {}]
  %s3 = inlined_call_operand.vmem [shape: f32[32,96], index: 3, kind: input, shape index: {}]
  %s4 = inlined_call_operand.vmem [shape: f32[3,32,32], index: 4, kind: input, shape index: {}]
  %s5 = inlined_call_operand.vmem [shape: f32[3,32,16], index: 5, kind: input, shape index: {}]
  %s6 = inlined_call_operand.vmem [shape: f32[3,1,16], index: 6, kind: input, shape index: {}]
  %s7 = inlined_call_operand.hbm [shape: f32[2,1,32], index: 7, kind: output, shape index: {}]
  %s8 = sld [smem:[#allocation0]]
  $region34: #{tpu_custom_call.1} parent=0
    _
  %s10 = ssub.s32 1, %s8
  %s11 = scalar_select 0, %s10, %s8
  %s12 = sshll.u32 %s0, 4
  %s13 = int_to_ptr.vmem [resolvable:$true] %s12
  %15 = dma.vmem_to_smem %s13, 16, [#allocation3], [#allocation2]
  %16 = dma.done [#allocation2], 16
  %17 = sfence
  $region1: #{tpu_custom_call.1} parent=0
    #allocation4 [shape = 'u8[1024]{0}', space=vmem, size = 0x400, scoped, tag = 'output window, operand 0, single buffered']
    #allocation5 [shape = 's32[1]{0}', space=sflag, size = 0x4, scoped, tag = 'scoped memory for tpu_custom_call.1']
    %18 = vsyncpa [#allocation5], 0
    // Predicated region
    $region2: #{tpu_custom_call.1} parent=1 // pred_check
      _
    $region3: #{tpu_custom_call.1} parent=1 // pred_check_branch
      %20 = sbr.rel (0) target = $region5
    $region4: #{tpu_custom_call.1} parent=1 // pred_region
      _
    $region5: #{tpu_custom_call.1} parent=1 // pred_fallthru
      _
    // Predicated region
    $region6: #{tpu_custom_call.1} parent=1 // pred_check
      _
    $region7: #{tpu_custom_call.1} parent=1 // pred_check_branch
      %22 = sbr.rel (0) target = $region9
    $region8: #{tpu_custom_call.1} parent=1 // pred_region
      _
    $region9: #{tpu_custom_call.1} parent=1 // pred_fallthru
      _
    // Predicated region
    $region10: #{tpu_custom_call.1} parent=1 // pred_check
      _
    $region11: #{tpu_custom_call.1} parent=1 // pred_check_branch
      %24 = sbr.rel (0) target = $region13
    $region12: #{tpu_custom_call.1} parent=1 // pred_region
      _
    $region13: #{tpu_custom_call.1} parent=1 // pred_fallthru
      _
    // Predicated region
    $region14: #{tpu_custom_call.1} parent=1 // pred_check
      _
    $region15: #{tpu_custom_call.1} parent=1 // pred_check_branch
      %26 = sbr.rel (0) target = $region17
    $region16: #{tpu_custom_call.1} parent=1 // pred_region
      _
    $region17: #{tpu_custom_call.1} parent=1 // pred_fallthru
      _
    // Predicated region
    $region18: #{tpu_custom_call.1} parent=1 // pred_check
      _
    $region19: #{tpu_custom_call.1} parent=1 // pred_check_branch
      %28 = sbr.rel (0) target = $region21
    $region20: #{tpu_custom_call.1} parent=1 // pred_region
      _
    $region21: #{tpu_custom_call.1} parent=1 // pred_fallthru
      _
    // Predicated region
    $region22: #{tpu_custom_call.1} parent=1 // pred_check
      _
    $region23: #{tpu_custom_call.1} parent=1 // pred_check_branch
      %30 = sbr.rel (0) target = $region25
    $region24: #{tpu_custom_call.1} parent=1 // pred_region
      _
    $region25: #{tpu_custom_call.1} parent=1 // pred_fallthru
      _
    %v31 = vld [vmem:[%s1] sm:$0x1f]
    %v32 = vld [vmem:[%s1 + $0x8] sm:$0x1f]
    %v33 = vld [vmem:[%s1 + $0x10] sm:$0x1f]
    %v34 = vld [vmem:[%s1 + $0x18] sm:$0x1f]
    %v35 = vld [vmem:[%s1 + $0x20] sm:$0x1f]
    %v36 = vld [vmem:[%s1 + $0x28] sm:$0x1f]
    %v37 = vld [vmem:[%s1 + $0x30] sm:$0x1f]
    %v38 = vld [vmem:[%s1 + $0x38] sm:$0x1f]
    %v39 = vld [vmem:[%s1 + $0x40] sm:$0x1f]
    %v40 = vld [vmem:[%s1 + $0x48] sm:$0x1f]
    %v41 = vld [vmem:[%s1 + $0x50] sm:$0x1f]
    %v42 = vld [vmem:[%s1 + $0x58] sm:$0x1f]
    %v43 = vld [vmem:[%s1 + $0x60] sm:$0x1f]
    %v44 = vld [vmem:[%s1 + $0x68] sm:$0x1f]
    %v45 = vld [vmem:[%s1 + $0x70] sm:$0x1f]
    %v46 = vld [vmem:[%s1 + $0x78] sm:$0x1f]
    %vm47 = vcmask 258048
    %v48 = vsel %vm47, %v31, 0.0
    %v49 = vrot.slane %v48, 4
    %v50 = vadd.f32 %v48, %v49
    %v51 = vrot.slane %v50, 2
    %v52 = vadd.f32 %v50, %v51
    %v53 = vrot.slane %v52, 1
    %v54 = vadd.f32 %v52, %v53
    %v55 = vsel %vm47, %v32, 0.0
    %v56 = vrot.slane %v55, 4
    %v57 = vadd.f32 %v55, %v56
    %v58 = vrot.slane %v57, 2
    %v59 = vadd.f32 %v57, %v58
    %v60 = vrot.slane %v59, 1
    %v61 = vadd.f32 %v59, %v60
    %v62 = vsel %vm47, %v33, 0.0
    %v63 = vrot.slane %v62, 4
    %v64 = vadd.f32 %v62, %v63
    %v65 = vrot.slane %v64, 2
    %v66 = vadd.f32 %v64, %v65
    %v67 = vrot.slane %v66, 1
    %v68 = vadd.f32 %v66, %v67
    %v69 = vsel %vm47, %v34, 0.0
    %v70 = vrot.slane %v69, 4
    %v71 = vadd.f32 %v69, %v70
    %v72 = vrot.slane %v71, 2
    %v73 = vadd.f32 %v71, %v72
    %v74 = vrot.slane %v73, 1
    %v75 = vadd.f32 %v73, %v74
    %v76 = vsel %vm47, %v35, 0.0
    %v77 = vrot.slane %v76, 4
    %v78 = vadd.f32 %v76, %v77
    %v79 = vrot.slane %v78, 2
    %v80 = vadd.f32 %v78, %v79
    %v81 = vrot.slane %v80, 1
    %v82 = vadd.f32 %v80, %v81
    %v83 = vsel %vm47, %v36, 0.0
    %v84 = vrot.slane %v83, 4
    %v85 = vadd.f32 %v83, %v84
    %v86 = vrot.slane %v85, 2
    %v87 = vadd.f32 %v85, %v86
    %v88 = vrot.slane %v87, 1
    %v89 = vadd.f32 %v87, %v88
    %v90 = vsel %vm47, %v37, 0.0
    %v91 = vrot.slane %v90, 4
    %v92 = vadd.f32 %v90, %v91
    %v93 = vrot.slane %v92, 2
    %v94 = vadd.f32 %v92, %v93
    %v95 = vrot.slane %v94, 1
    %v96 = vadd.f32 %v94, %v95
    %v97 = vsel %vm47, %v38, 0.0
    %v98 = vrot.slane %v97, 4
    %v99 = vadd.f32 %v97, %v98
    %v100 = vrot.slane %v99, 2
    %v101 = vadd.f32 %v99, %v100
    %v102 = vrot.slane %v101, 1
    %v103 = vadd.f32 %v101, %v102
    %v104 = vsel %vm47, %v39, 0.0
    %v105 = vrot.slane %v104, 4
    %v106 = vadd.f32 %v104, %v105
    %v107 = vrot.slane %v106, 2
    %v108 = vadd.f32 %v106, %v107
    %v109 = vrot.slane %v108, 1
    %v110 = vadd.f32 %v108, %v109
    %v111 = vsel %vm47, %v40, 0.0
    %v112 = vrot.slane %v111, 4
    %v113 = vadd.f32 %v111, %v112
    %v114 = vrot.slane %v113, 2
    %v115 = vadd.f32 %v113, %v114
    %v116 = vrot.slane %v115, 1
    %v117 = vadd.f32 %v115, %v116
    %v118 = vsel %vm47, %v41, 0.0
    %v119 = vrot.slane %v118, 4
    %v120 = vadd.f32 %v118, %v119
    %v121 = vrot.slane %v120, 2
    %v122 = vadd.f32 %v120, %v121
    %v123 = vrot.slane %v122, 1
    %v124 = vadd.f32 %v122, %v123
    %v125 = vsel %vm47, %v42, 0.0
    %v126 = vrot.slane %v125, 4
    %v127 = vadd.f32 %v125, %v126
    %v128 = vrot.slane %v127, 2
    %v129 = vadd.f32 %v127, %v128
    %v130 = vrot.slane %v129, 1
    %v131 = vadd.f32 %v129, %v130
    %v132 = vsel %vm47, %v43, 0.0
    %v133 = vrot.slane %v132, 4
    %v134 = vadd.f32 %v132, %v133
    %v135 = vrot.slane %v134, 2
    %v136 = vadd.f32 %v134, %v135
    %v137 = vrot.slane %v136, 1
    %v138 = vadd.f32 %v136, %v137
    %v139 = vsel %vm47, %v44, 0.0
    %v140 = vrot.slane %v139, 4
    %v141 = vadd.f32 %v139, %v140
    %v142 = vrot.slane %v141, 2
    %v143 = vadd.f32 %v141, %v142
    %v144 = vrot.slane %v143, 1
    %v145 = vadd.f32 %v143, %v144
    %v146 = vsel %vm47, %v45, 0.0
    %v147 = vrot.slane %v146, 4
    %v148 = vadd.f32 %v146, %v147
    %v149 = vrot.slane %v148, 2
    %v150 = vadd.f32 %v148, %v149
    %v151 = vrot.slane %v150, 1
    %v152 = vadd.f32 %v150, %v151
    %v153 = vsel %vm47, %v46, 0.0
    %v154 = vrot.slane %v153, 4
    %v155 = vadd.f32 %v153, %v154
    %v156 = vrot.slane %v155, 2
    %v157 = vadd.f32 %v155, %v156
    %v158 = vrot.slane %v157, 1
    %v159 = vadd.f32 %v157, %v158
    %v160 = vrcp.pop 5.0
    %v161 = vmul.f32 %v54, %v160
    %v162 = vmul.f32 %v61, %v160
    %v163 = vmul.f32 %v68, %v160
    %v164 = vmul.f32 %v75, %v160
    %v165 = vmul.f32 %v82, %v160
    %v166 = vmul.f32 %v89, %v160
    %v167 = vmul.f32 %v96, %v160
    %v168 = vmul.f32 %v103, %v160
    %v169 = vmul.f32 %v110, %v160
    %v170 = vmul.f32 %v117, %v160
    %v171 = vmul.f32 %v124, %v160
    %v172 = vmul.f32 %v131, %v160
    %v173 = vmul.f32 %v138, %v160
    %v174 = vmul.f32 %v145, %v160
    %v175 = vmul.f32 %v152, %v160
    %v176 = vmul.f32 %v159, %v160
    %v177 = vld [vmem:[%s2] sm:$0x1]
    %v178 = vld [vmem:[%s2 + $0x1] sm:$0x1]
    %v179 = vld [vmem:[%s3] sm:$0xff]
    %v180 = vld [vmem:[%s3 + $0x8] sm:$0xff]
    %v181 = vld [vmem:[%s3 + $0x10] sm:$0xff]
    %v182 = vld [vmem:[%s3 + $0x18] sm:$0xff]
    %vm199 = vcmask 1041409
    %v200 = vsel %vm199, %v162, %v161
    %vm201 = vcmask 1042434
    %v202 = vsel %vm201, %v163, %v200
    %vm203 = vcmask 1043459
    %v204 = vsel %vm203, %v164, %v202
    %vm205 = vcmask 1044484
    %v206 = vsel %vm205, %v165, %v204
    %vm207 = vcmask 1045509
    %v208 = vsel %vm207, %v166, %v206
    %vm209 = vcmask 1046534
    %v210 = vsel %vm209, %v167, %v208
    %vm211 = vcmask 1047559
    %v212 = vsel %vm211, %v168, %v210
    %v213 = vsel %vm199, %v170, %v169
    %v214 = vsel %vm201, %v171, %v213
    %v215 = vsel %vm203, %v172, %v214
    %v216 = vsel %vm205, %v173, %v215
    %v217 = vsel %vm207, %v174, %v216
    %v218 = vsel %vm209, %v175, %v217
    %v219 = vsel %vm211, %v176, %v218
    %vm220 = vcmask 261120
    %v221 = vsel %vm220, %v212, 0
    %v223 = vsel %vm220, %v219, 0
    %225 = vmatprep.subr.mxu0 0.0
    %226 = vmatpush1.msra.mxu0 0.0
    %227 = vmatprep.subr.mxu0 0.0
    %228 = vmatpush1.msra.mxu0 0.0
    %229 = vmatprep.subr.mxu0 0.0
    %230 = vmatpush1.msra.mxu0 0.0
    %231 = vmatprep.subr.mxu0 0.0
    %232 = vmatpush1.msra.mxu0 0.0
    %233 = vmatprep.subr.mxu0 0.0
    %234 = vmatpush1.msra.mxu0 0.0
    %235 = vmatprep.subr.mxu0 0.0
    %236 = vmatpush1.msra.mxu0 0.0
    %237 = vmatprep.subr.mxu0 0.0
    %238 = vmatpush1.msra.mxu0 0.0
    %239 = vmatprep.subr.mxu0 0.0
    %240 = vmatpush1.msra.mxu0 0.0
    %241 = vmatprep.subr.mxu0 0.0
    %242 = vmatpush1.msra.mxu0 0.0
    %243 = vmatprep.subr.mxu0 0.0
    %244 = vmatpush1.msra.mxu0 0.0
    %245 = vmatprep.subr.mxu0 0.0
    %246 = vmatpush1.msra.mxu0 0.0
    %247 = vmatprep.subr.mxu0 0.0
    %248 = vmatpush1.msra.mxu0 0.0
    %249 = vmatprep.subr.mxu0 0.0
    %250 = vmatpush1.msra.mxu0 %v182
    %251 = vmatprep.subr.mxu0 0.0
    %252 = vmatpush1.msra.mxu0 %v181
    %253 = vmatprep.subr.mxu0 0.0
    %254 = vmatpush1.msra.mxu0 %v180
    %255 = vmatprep.subr.mxu0 0.0
    %256 = vmatpush1.msra.mxu0 %v179
    %257 = vmatprep.subr.mxu0 0.0
    %258 = vmatpush2.msra.mxu0 0.0
    %259 = vmatprep.subr.mxu0 0.0
    %260 = vmatpush2.msra.mxu0 0.0
    %261 = vmatprep.subr.mxu0 0.0
    %262 = vmatpush2.msra.mxu0 0.0
    %263 = vmatprep.subr.mxu0 0.0
    %264 = vmatpush2.msra.mxu0 0.0
    %265 = vmatprep.subr.mxu0 0.0
    %266 = vmatpush2.msra.mxu0 0.0
    %267 = vmatprep.subr.mxu0 0.0
    %268 = vmatpush2.msra.mxu0 0.0
    %269 = vmatprep.subr.mxu0 0.0
    %270 = vmatpush2.msra.mxu0 0.0
    %271 = vmatprep.subr.mxu0 0.0
    %272 = vmatpush2.msra.mxu0 0.0
    %273 = vmatprep.subr.mxu0 0.0
    %274 = vmatpush2.msra.mxu0 0.0
    %275 = vmatprep.subr.mxu0 0.0
    %276 = vmatpush2.msra.mxu0 0.0
    %277 = vmatprep.subr.mxu0 0.0
    %278 = vmatpush2.msra.mxu0 0.0
    %279 = vmatprep.subr.mxu0 0.0
    %280 = vmatpush2.msra.mxu0 0.0
    %281 = vmatprep.subr.mxu0 0.0
    %282 = vmatpush2.msra.mxu0 0.0
    %283 = vmatprep.subr.mxu0 0.0
    %284 = vmatpush2.msra.mxu0 0.0
    %285 = vmatprep.subr.mxu0 0.0
    %286 = vmatpush2.msra.mxu0 0.0
    %287 = vmatprep.subr.mxu0 0.0
    %288 = vmatpush2.msra.mxu0 0.0
    %289 = vmatprep.mubr.f32.mxu0 0.0
    %290 = vmatmul.mubr.f32.gmra.mxu0 %v221
    %v291 = vpop.f32.mrf.mxu0
    %v292 = vadd.f32 0.0, %v291
    %v293 = vpop.f32.mrf.mxu0
    %294 = vmatprep.mubr.f32.mxu0 0.0
    %295 = vmatmul.mubr.f32.gmra.mxu0 %v223
    %v296 = vpop.f32.mrf.mxu0
    %v297 = vadd.f32 0.0, %v296
    %v298 = vpop.f32.mrf.mxu0
    %299 = vdwg.mxu0
    %s300 = smul.u32 0, 2
    %v301 = vlaneseq
    %v302 = vshrl.u32 %v301, 7
    %v303 = vlaneseq
    %v304 = vand.u32 %v303, 127
    %vm305 = vcmp.eq.s32.totalorder %v302, 0
    %s306 = sld [smem:[#allocation3 + %s300]]
    %v307 = vstv %s306
    %v308 = vsel %vm305, %v307, 0
    %vm309 = vcmp.eq.s32.totalorder %v302, 1
    %s310 = sadd.s32 %s300, 1
    %s311 = sld [smem:[#allocation3 + %s310]]
    %v312 = vstv %s311
    %v313 = vsel %vm309, %v312, %v308
    %vm314 = vcmp.lt.s32.totalorder %v304, %v313
    %v315 = vld [vmem:[%s4] sm:$0xff]
    %v316 = vld [vmem:[%s4 + $0x8] sm:$0xff]
    %v317 = vld [vmem:[%s4 + $0x10] sm:$0xff]
    %v318 = vld [vmem:[%s4 + $0x18] sm:$0xff]
    %v321 = vcombine.low %v177, %v178
    %v323 = vunpack.c.l.s4 1966171168
    %v324 = vunpack.c.0.s8 %v323
    %v325 = vlaneseq
    %v326 = vshrl.u32 %v325, 7
    %v327 = vsub.s32 %v324, %v326
    %v328 = vrot.slane %v321, %v327
    %v330 = vunpack.c.l.s4 1966171168
    %v331 = vunpack.c.0.s8 %v330
    %v332 = vlaneseq
    %v333 = vshrl.u32 %v332, 7
    %v334 = vsub.s32 %v331, %v333
    %v335 = vrot.slane %v328, %v334
    %v336 = vsel %vm220, %v335, 0
    %338 = vmatprep.subr.mxu0 0.0
    %339 = vmatpush1.msra.mxu0 0.0
    %340 = vmatprep.subr.mxu0 0.0
    %341 = vmatpush1.msra.mxu0 0.0
    %342 = vmatprep.subr.mxu0 0.0
    %343 = vmatpush1.msra.mxu0 0.0
    %344 = vmatprep.subr.mxu0 0.0
    %345 = vmatpush1.msra.mxu0 0.0
    %346 = vmatprep.subr.mxu0 0.0
    %347 = vmatpush1.msra.mxu0 0.0
    %348 = vmatprep.subr.mxu0 0.0
    %349 = vmatpush1.msra.mxu0 0.0
    %350 = vmatprep.subr.mxu0 0.0
    %351 = vmatpush1.msra.mxu0 0.0
    %352 = vmatprep.subr.mxu0 0.0
    %353 = vmatpush1.msra.mxu0 0.0
    %354 = vmatprep.subr.mxu0 0.0
    %355 = vmatpush1.msra.mxu0 0.0
    %356 = vmatprep.subr.mxu0 0.0
    %357 = vmatpush1.msra.mxu0 0.0
    %358 = vmatprep.subr.mxu0 0.0
    %359 = vmatpush1.msra.mxu0 0.0
    %360 = vmatprep.subr.mxu0 0.0
    %361 = vmatpush1.msra.mxu0 0.0
    %362 = vmatprep.subr.mxu0 0.0
    %363 = vmatpush1.msra.mxu0 %v318
    %364 = vmatprep.subr.mxu0 0.0
    %365 = vmatpush1.msra.mxu0 %v317
    %366 = vmatprep.subr.mxu0 0.0
    %367 = vmatpush1.msra.mxu0 %v316
    %368 = vmatprep.subr.mxu0 0.0
    %369 = vmatpush1.msra.mxu0 %v315
    %370 = vmatprep.subr.mxu0 0.0
    %371 = vmatpush2.msra.mxu0 0.0
    %372 = vmatprep.subr.mxu0 0.0
    %373 = vmatpush2.msra.mxu0 0.0
    %374 = vmatprep.subr.mxu0 0.0
    %375 = vmatpush2.msra.mxu0 0.0
    %376 = vmatprep.subr.mxu0 0.0
    %377 = vmatpush2.msra.mxu0 0.0
    %378 = vmatprep.subr.mxu0 0.0
    %379 = vmatpush2.msra.mxu0 0.0
    %380 = vmatprep.subr.mxu0 0.0
    %381 = vmatpush2.msra.mxu0 0.0
    %382 = vmatprep.subr.mxu0 0.0
    %383 = vmatpush2.msra.mxu0 0.0
    %384 = vmatprep.subr.mxu0 0.0
    %385 = vmatpush2.msra.mxu0 0.0
    %386 = vmatprep.subr.mxu0 0.0
    %387 = vmatpush2.msra.mxu0 0.0
    %388 = vmatprep.subr.mxu0 0.0
    %389 = vmatpush2.msra.mxu0 0.0
    %390 = vmatprep.subr.mxu0 0.0
    %391 = vmatpush2.msra.mxu0 0.0
    %392 = vmatprep.subr.mxu0 0.0
    %393 = vmatpush2.msra.mxu0 0.0
    %394 = vmatprep.subr.mxu0 0.0
    %395 = vmatpush2.msra.mxu0 0.0
    %396 = vmatprep.subr.mxu0 0.0
    %397 = vmatpush2.msra.mxu0 0.0
    %398 = vmatprep.subr.mxu0 0.0
    %399 = vmatpush2.msra.mxu0 0.0
    %400 = vmatprep.subr.mxu0 0.0
    %401 = vmatpush2.msra.mxu0 0.0
    %402 = vmatprep.mubr.f32.mxu0 0.0
    %403 = vmatmul.mubr.f32.gmra.mxu0 %v336
    %v404 = vpop.f32.mrf.mxu0
    %v405 = vadd.f32 0.0, %v404
    %v406 = vpop.f32.mrf.mxu0
    %407 = vdwg.mxu0
    %v410 = vunpack.c.l.s4 1966171168
    %v411 = vunpack.c.0.s8 %v410
    %v412 = vlaneseq
    %v413 = vshrl.u32 %v412, 7
    %v414 = vsub.s32 %v411, %v413
    %v415 = vrot.slane %v405, %v414
    %v416 = vcombine.high %v415, %v415
    %v418 = vunpack.c.l.s4 1966171168
    %v419 = vunpack.c.0.s8 %v418
    %v420 = vlaneseq
    %v421 = vshrl.u32 %v420, 7
    %v422 = vsub.s32 %v419, %v421
    %v423 = vrot.slane %v415, %v422
    %v425 = vunpack.c.l.s4 1966171168
    %v426 = vunpack.c.0.s8 %v425
    %v427 = vlaneseq
    %v428 = vshrl.u32 %v427, 7
    %v429 = vsub.s32 %v426, %v428
    %v430 = vrot.slane %v416, %v429
    %v431 = vlaneseq
    %v432 = vshrl.u32 %v431, 7
    %v433 = vsub.s32 0, %v432
    %v434 = vrot.slane %v423, %v433
    %v435 = vlaneseq
    %v436 = vshrl.u32 %v435, 7
    %v437 = vsub.s32 0, %v436
    %v438 = vrot.slane %v430, %v437
    %v441 = vadd.f32 %v292, %v434
    %v442 = vadd.f32 %v297, %v438
    %v443 = vtanh.pop %v441
    %v444 = vtanh.pop %v442
    %v445 = vld [vmem:[%s5] sm:$0xff]
    %v446 = vld [vmem:[%s5 + $0x8] sm:$0xff]
    %v447 = vld [vmem:[%s5 + $0x10] sm:$0xff]
    %v448 = vld [vmem:[%s5 + $0x18] sm:$0xff]
    %v450 = vsel %vm220, %v443, 0
    %v453 = vsel %vm220, %v444, 0
    %455 = vmatprep.subr.mxu0 0.0
    %456 = vmatpush1.msra.mxu0 0.0
    %457 = vmatprep.subr.mxu0 0.0
    %458 = vmatpush1.msra.mxu0 0.0
    %459 = vmatprep.subr.mxu0 0.0
    %460 = vmatpush1.msra.mxu0 0.0
    %461 = vmatprep.subr.mxu0 0.0
    %462 = vmatpush1.msra.mxu0 0.0
    %463 = vmatprep.subr.mxu0 0.0
    %464 = vmatpush1.msra.mxu0 0.0
    %465 = vmatprep.subr.mxu0 0.0
    %466 = vmatpush1.msra.mxu0 0.0
    %467 = vmatprep.subr.mxu0 0.0
    %468 = vmatpush1.msra.mxu0 0.0
    %469 = vmatprep.subr.mxu0 0.0
    %470 = vmatpush1.msra.mxu0 0.0
    %471 = vmatprep.subr.mxu0 0.0
    %472 = vmatpush1.msra.mxu0 0.0
    %473 = vmatprep.subr.mxu0 0.0
    %474 = vmatpush1.msra.mxu0 0.0
    %475 = vmatprep.subr.mxu0 0.0
    %476 = vmatpush1.msra.mxu0 0.0
    %477 = vmatprep.subr.mxu0 0.0
    %478 = vmatpush1.msra.mxu0 0.0
    %479 = vmatprep.subr.mxu0 0.0
    %480 = vmatpush1.msra.mxu0 %v448
    %481 = vmatprep.subr.mxu0 0.0
    %482 = vmatpush1.msra.mxu0 %v447
    %483 = vmatprep.subr.mxu0 0.0
    %484 = vmatpush1.msra.mxu0 %v446
    %485 = vmatprep.subr.mxu0 0.0
    %486 = vmatpush1.msra.mxu0 %v445
    %487 = vmatprep.subr.mxu0 0.0
    %488 = vmatpush2.msra.mxu0 0.0
    %489 = vmatprep.subr.mxu0 0.0
    %490 = vmatpush2.msra.mxu0 0.0
    %491 = vmatprep.subr.mxu0 0.0
    %492 = vmatpush2.msra.mxu0 0.0
    %493 = vmatprep.subr.mxu0 0.0
    %494 = vmatpush2.msra.mxu0 0.0
    %495 = vmatprep.subr.mxu0 0.0
    %496 = vmatpush2.msra.mxu0 0.0
    %497 = vmatprep.subr.mxu0 0.0
    %498 = vmatpush2.msra.mxu0 0.0
    %499 = vmatprep.subr.mxu0 0.0
    %500 = vmatpush2.msra.mxu0 0.0
    %501 = vmatprep.subr.mxu0 0.0
    %502 = vmatpush2.msra.mxu0 0.0
    %503 = vmatprep.subr.mxu0 0.0
    %504 = vmatpush2.msra.mxu0 0.0
    %505 = vmatprep.subr.mxu0 0.0
    %506 = vmatpush2.msra.mxu0 0.0
    %507 = vmatprep.subr.mxu0 0.0
    %508 = vmatpush2.msra.mxu0 0.0
    %509 = vmatprep.subr.mxu0 0.0
    %510 = vmatpush2.msra.mxu0 0.0
    %511 = vmatprep.subr.mxu0 0.0
    %512 = vmatpush2.msra.mxu0 0.0
    %513 = vmatprep.subr.mxu0 0.0
    %514 = vmatpush2.msra.mxu0 0.0
    %515 = vmatprep.subr.mxu0 0.0
    %516 = vmatpush2.msra.mxu0 0.0
    %517 = vmatprep.subr.mxu0 0.0
    %518 = vmatpush2.msra.mxu0 0.0
    %519 = vmatprep.mubr.f32.mxu0 0.0
    %520 = vmatmul.mubr.f32.gmra.mxu0 %v450
    %v521 = vpop.f32.mrf.mxu0
    %v522 = vadd.f32 0.0, %v521
    %v523 = vpop.f32.mrf.mxu0
    %524 = vmatprep.mubr.f32.mxu0 0.0
    %525 = vmatmul.mubr.f32.gmra.mxu0 %v453
    %v526 = vpop.f32.mrf.mxu0
    %v527 = vadd.f32 0.0, %v526
    %v528 = vpop.f32.mrf.mxu0
    %529 = vdwg.mxu0
    %v530 = vtanh.pop %v522
    %v531 = vtanh.pop %v527
    %v532 = vld [vmem:[%s6] sm:$0x1]
    %v534 = vlaneseq
    %v535 = vshrl.u32 %v534, 7
    %v536 = vsub.s32 0, %v535
    %v537 = vrot.slane %v532, %v536
    %v539 = vmul.f32 %v530, %v537
    %v540 = vmul.f32 %v531, %v537
    %vm541 = vcmask 130048
    %v542 = vsel %vm541, %v539, 0.0
    %543 = vadd.xlane.f32.xlu0 %v542
    %v544 = vpop.xlane.xlu0 %543
    %v545 = vsel %vm541, %v540, 0.0
    %546 = vadd.xlane.f32.xlu0 %v545
    %v547 = vpop.xlane.xlu0 %546
    %v550 = vlaneseq
    %v551 = vshrl.u32 %v550, 7
    %v552 = vsub.s32 %v304, %v551
    %v553 = vrot.slane %v544, %v552
    %v554 = vlaneseq
    %v555 = vshrl.u32 %v554, 7
    %v556 = vsub.s32 %v304, %v555
    %v557 = vrot.slane %v547, %v556
    %v558 = vsel %vm199, %v557, %v553
    %v560 = vsel %vm314, %v558, -1e+32
    %vm561 = vcmask 58368
    %v562 = vsel %vm561, %v560, -inf
    %563 = vmax.xlane.f32.xlu0 %v562
    %v564 = vpop.xlane.xlu0 %563
    %v565 = vsub.f32 %v560, %v564
    %v566 = vmul.f32 %v565, 1.442695
    %v567 = vpow.pop %v566
    %v568 = vsel %vm561, %v567, 0.0
    %569 = vadd.xlane.f32.xlu0 %v568
    %v570 = vpop.xlane.xlu0 %569
    %v571 = vrcp.pop %v570
    %v572 = vmul.f32 %v567, %v571
    %v573 = vlaneseq
    %v574 = vshrl.u32 %v573, 7
    %v575 = vsub.s32 0, %v574
    %v576 = vrot.slane %v572, %v575
    %578 = vbcast.lane.b32.xlu0 %v576, 256
    %v579 = vpop.permute.xlu0 %578
    %v580 = vlaneseq
    %v581 = vshrl.u32 %v580, 7
    %v582 = vsub.s32 1, %v581
    %v583 = vrot.slane %v572, %v582
    %585 = vbcast.lane.b32.xlu0 %v583, 256
    %v586 = vpop.permute.xlu0 %585
    %v589 = vmul.f32 %v579, %v212
    %v590 = vmul.f32 %v586, %v219
    %v591 = vsel %vm220, %v589, 0.0
    %v592 = vrot.slane %v591, 4
    %v593 = vadd.f32 %v591, %v592
    %v594 = vrot.slane %v593, 2
    %v595 = vadd.f32 %v593, %v594
    %v596 = vrot.slane %v595, 1
    %v597 = vadd.f32 %v595, %v596
    %v598 = vsel %vm220, %v590, 0.0
    %v599 = vrot.slane %v598, 4
    %v600 = vadd.f32 %v598, %v599
    %v601 = vrot.slane %v600, 2
    %v602 = vadd.f32 %v600, %v601
    %v603 = vrot.slane %v602, 1
    %v604 = vadd.f32 %v602, %v603
    %v605 = vadd.f32 %v177, %v597
    %v606 = vadd.f32 %v178, %v604
    %s607 = scalar_lea.vmem %s4, 32
    %v608 = vld [vmem:[%s607] sm:$0xff]
    %v609 = vld [vmem:[%s607 + $0x8] sm:$0xff]
    %v610 = vld [vmem:[%s607 + $0x10] sm:$0xff]
    %v611 = vld [vmem:[%s607 + $0x18] sm:$0xff]
    %v614 = vcombine.low %v605, %v606
    %v616 = vunpack.c.l.s4 1966171168
    %v617 = vunpack.c.0.s8 %v616
    %v618 = vlaneseq
    %v619 = vshrl.u32 %v618, 7
    %v620 = vsub.s32 %v617, %v619
    %v621 = vrot.slane %v614, %v620
    %v623 = vunpack.c.l.s4 1966171168
    %v624 = vunpack.c.0.s8 %v623
    %v625 = vlaneseq
    %v626 = vshrl.u32 %v625, 7
    %v627 = vsub.s32 %v624, %v626
    %v628 = vrot.slane %v621, %v627
    %v629 = vsel %vm220, %v628, 0
    %631 = vmatprep.subr.mxu0 0.0
    %632 = vmatpush1.msra.mxu0 0.0
    %633 = vmatprep.subr.mxu0 0.0
    %634 = vmatpush1.msra.mxu0 0.0
    %635 = vmatprep.subr.mxu0 0.0
    %636 = vmatpush1.msra.mxu0 0.0
    %637 = vmatprep.subr.mxu0 0.0
    %638 = vmatpush1.msra.mxu0 0.0
    %639 = vmatprep.subr.mxu0 0.0
    %640 = vmatpush1.msra.mxu0 0.0
    %641 = vmatprep.subr.mxu0 0.0
    %642 = vmatpush1.msra.mxu0 0.0
    %643 = vmatprep.subr.mxu0 0.0
    %644 = vmatpush1.msra.mxu0 0.0
    %645 = vmatprep.subr.mxu0 0.0
    %646 = vmatpush1.msra.mxu0 0.0
    %647 = vmatprep.subr.mxu0 0.0
    %648 = vmatpush1.msra.mxu0 0.0
    %649 = vmatprep.subr.mxu0 0.0
    %650 = vmatpush1.msra.mxu0 0.0
    %651 = vmatprep.subr.mxu0 0.0
    %652 = vmatpush1.msra.mxu0 0.0
    %653 = vmatprep.subr.mxu0 0.0
    %654 = vmatpush1.msra.mxu0 0.0
    %655 = vmatprep.subr.mxu0 0.0
    %656 = vmatpush1.msra.mxu0 %v611
    %657 = vmatprep.subr.mxu0 0.0
    %658 = vmatpush1.msra.mxu0 %v610
    %659 = vmatprep.subr.mxu0 0.0
    %660 = vmatpush1.msra.mxu0 %v609
    %661 = vmatprep.subr.mxu0 0.0
    %662 = vmatpush1.msra.mxu0 %v608
    %663 = vmatprep.subr.mxu0 0.0
    %664 = vmatpush2.msra.mxu0 0.0
    %665 = vmatprep.subr.mxu0 0.0
    %666 = vmatpush2.msra.mxu0 0.0
    %667 = vmatprep.subr.mxu0 0.0
    %668 = vmatpush2.msra.mxu0 0.0
    %669 = vmatprep.subr.mxu0 0.0
    %670 = vmatpush2.msra.mxu0 0.0
    %671 = vmatprep.subr.mxu0 0.0
    %672 = vmatpush2.msra.mxu0 0.0
    %673 = vmatprep.subr.mxu0 0.0
    %674 = vmatpush2.msra.mxu0 0.0
    %675 = vmatprep.subr.mxu0 0.0
    %676 = vmatpush2.msra.mxu0 0.0
    %677 = vmatprep.subr.mxu0 0.0
    %678 = vmatpush2.msra.mxu0 0.0
    %679 = vmatprep.subr.mxu0 0.0
    %680 = vmatpush2.msra.mxu0 0.0
    %681 = vmatprep.subr.mxu0 0.0
    %682 = vmatpush2.msra.mxu0 0.0
    %683 = vmatprep.subr.mxu0 0.0
    %684 = vmatpush2.msra.mxu0 0.0
    %685 = vmatprep.subr.mxu0 0.0
    %686 = vmatpush2.msra.mxu0 0.0
    %687 = vmatprep.subr.mxu0 0.0
    %688 = vmatpush2.msra.mxu0 0.0
    %689 = vmatprep.subr.mxu0 0.0
    %690 = vmatpush2.msra.mxu0 0.0
    %691 = vmatprep.subr.mxu0 0.0
    %692 = vmatpush2.msra.mxu0 0.0
    %693 = vmatprep.subr.mxu0 0.0
    %694 = vmatpush2.msra.mxu0 0.0
    %695 = vmatprep.mubr.f32.mxu0 0.0
    %696 = vmatmul.mubr.f32.gmra.mxu0 %v629
    %v697 = vpop.f32.mrf.mxu0
    %v698 = vadd.f32 0.0, %v697
    %v699 = vpop.f32.mrf.mxu0
    %700 = vdwg.mxu0
    %v703 = vunpack.c.l.s4 1966171168
    %v704 = vunpack.c.0.s8 %v703
    %v705 = vlaneseq
    %v706 = vshrl.u32 %v705, 7
    %v707 = vsub.s32 %v704, %v706
    %v708 = vrot.slane %v698, %v707
    %v709 = vcombine.high %v708, %v708
    %v711 = vunpack.c.l.s4 1966171168
    %v712 = vunpack.c.0.s8 %v711
    %v713 = vlaneseq
    %v714 = vshrl.u32 %v713, 7
    %v715 = vsub.s32 %v712, %v714
    %v716 = vrot.slane %v708, %v715
    %v718 = vunpack.c.l.s4 1966171168
    %v719 = vunpack.c.0.s8 %v718
    %v720 = vlaneseq
    %v721 = vshrl.u32 %v720, 7
    %v722 = vsub.s32 %v719, %v721
    %v723 = vrot.slane %v709, %v722
    %v724 = vlaneseq
    %v725 = vshrl.u32 %v724, 7
    %v726 = vsub.s32 0, %v725
    %v727 = vrot.slane %v716, %v726
    %v728 = vlaneseq
    %v729 = vshrl.u32 %v728, 7
    %v730 = vsub.s32 0, %v729
    %v731 = vrot.slane %v723, %v730
    %732 = vrot.lane.b32.xlu0 %v727, 32
    %v733 = vpop.permute.xlu0 %732
    %734 = vrot.lane.b32.xlu0 %v731, 32
    %v735 = vpop.permute.xlu0 %734
    %v738 = vadd.f32 %v292, %v733
    %v739 = vadd.f32 %v297, %v735
    %v740 = vtanh.pop %v738
    %v741 = vtanh.pop %v739
    %s742 = scalar_lea.vmem %s5, 32
    %v743 = vld [vmem:[%s742] sm:$0xff]
    %v744 = vld [vmem:[%s742 + $0x8] sm:$0xff]
    %v745 = vld [vmem:[%s742 + $0x10] sm:$0xff]
    %v746 = vld [vmem:[%s742 + $0x18] sm:$0xff]
    %749 = vrot.lane.b32.xlu0 %v740, 96
    %v750 = vpop.permute.xlu0 %749
    %751 = vrot.lane.b32.xlu0 %v741, 96
    %v752 = vpop.permute.xlu0 %751
    %v753 = vsel %vm220, %v750, 0
    %v755 = vsel %vm220, %v752, 0
    %757 = vmatprep.subr.mxu0 0.0
    %758 = vmatpush1.msra.mxu0 0.0
    %759 = vmatprep.subr.mxu0 0.0
    %760 = vmatpush1.msra.mxu0 0.0
    %761 = vmatprep.subr.mxu0 0.0
    %762 = vmatpush1.msra.mxu0 0.0
    %763 = vmatprep.subr.mxu0 0.0
    %764 = vmatpush1.msra.mxu0 0.0
    %765 = vmatprep.subr.mxu0 0.0
    %766 = vmatpush1.msra.mxu0 0.0
    %767 = vmatprep.subr.mxu0 0.0
    %768 = vmatpush1.msra.mxu0 0.0
    %769 = vmatprep.subr.mxu0 0.0
    %770 = vmatpush1.msra.mxu0 0.0
    %771 = vmatprep.subr.mxu0 0.0
    %772 = vmatpush1.msra.mxu0 0.0
    %773 = vmatprep.subr.mxu0 0.0
    %774 = vmatpush1.msra.mxu0 0.0
    %775 = vmatprep.subr.mxu0 0.0
    %776 = vmatpush1.msra.mxu0 0.0
    %777 = vmatprep.subr.mxu0 0.0
    %778 = vmatpush1.msra.mxu0 0.0
    %779 = vmatprep.subr.mxu0 0.0
    %780 = vmatpush1.msra.mxu0 0.0
    %781 = vmatprep.subr.mxu0 0.0
    %782 = vmatpush1.msra.mxu0 %v746
    %783 = vmatprep.subr.mxu0 0.0
    %784 = vmatpush1.msra.mxu0 %v745
    %785 = vmatprep.subr.mxu0 0.0
    %786 = vmatpush1.msra.mxu0 %v744
    %787 = vmatprep.subr.mxu0 0.0
    %788 = vmatpush1.msra.mxu0 %v743
    %789 = vmatprep.subr.mxu0 0.0
    %790 = vmatpush2.msra.mxu0 0.0
    %791 = vmatprep.subr.mxu0 0.0
    %792 = vmatpush2.msra.mxu0 0.0
    %793 = vmatprep.subr.mxu0 0.0
    %794 = vmatpush2.msra.mxu0 0.0
    %795 = vmatprep.subr.mxu0 0.0
    %796 = vmatpush2.msra.mxu0 0.0
    %797 = vmatprep.subr.mxu0 0.0
    %798 = vmatpush2.msra.mxu0 0.0
    %799 = vmatprep.subr.mxu0 0.0
    %800 = vmatpush2.msra.mxu0 0.0
    %801 = vmatprep.subr.mxu0 0.0
    %802 = vmatpush2.msra.mxu0 0.0
    %803 = vmatprep.subr.mxu0 0.0
    %804 = vmatpush2.msra.mxu0 0.0
    %805 = vmatprep.subr.mxu0 0.0
    %806 = vmatpush2.msra.mxu0 0.0
    %807 = vmatprep.subr.mxu0 0.0
    %808 = vmatpush2.msra.mxu0 0.0
    %809 = vmatprep.subr.mxu0 0.0
    %810 = vmatpush2.msra.mxu0 0.0
    %811 = vmatprep.subr.mxu0 0.0
    %812 = vmatpush2.msra.mxu0 0.0
    %813 = vmatprep.subr.mxu0 0.0
    %814 = vmatpush2.msra.mxu0 0.0
    %815 = vmatprep.subr.mxu0 0.0
    %816 = vmatpush2.msra.mxu0 0.0
    %817 = vmatprep.subr.mxu0 0.0
    %818 = vmatpush2.msra.mxu0 0.0
    %819 = vmatprep.subr.mxu0 0.0
    %820 = vmatpush2.msra.mxu0 0.0
    %821 = vmatprep.mubr.f32.mxu0 0.0
    %822 = vmatmul.mubr.f32.gmra.mxu0 %v753
    %v823 = vpop.f32.mrf.mxu0
    %v824 = vadd.f32 0.0, %v823
    %v825 = vpop.f32.mrf.mxu0
    %826 = vmatprep.mubr.f32.mxu0 0.0
    %827 = vmatmul.mubr.f32.gmra.mxu0 %v755
    %v828 = vpop.f32.mrf.mxu0
    %v829 = vadd.f32 0.0, %v828
    %v830 = vpop.f32.mrf.mxu0
    %831 = vdwg.mxu0
    %v832 = vtanh.pop %v824
    %v833 = vtanh.pop %v829
    %s834 = scalar_lea.vmem %s6, 1
    %v835 = vld [vmem:[%s834] sm:$0x1]
    %v837 = vlaneseq
    %v838 = vshrl.u32 %v837, 7
    %v839 = vsub.s32 0, %v838
    %v840 = vrot.slane %v835, %v839
    %v842 = vmul.f32 %v832, %v840
    %v843 = vmul.f32 %v833, %v840
    %v844 = vsel %vm541, %v842, 0.0
    %845 = vadd.xlane.f32.xlu0 %v844
    %v846 = vpop.xlane.xlu0 %845
    %v847 = vsel %vm541, %v843, 0.0
    %848 = vadd.xlane.f32.xlu0 %v847
    %v849 = vpop.xlane.xlu0 %848
    %v852 = vlaneseq
    %v853 = vshrl.u32 %v852, 7
    %v854 = vsub.s32 %v304, %v853
    %v855 = vrot.slane %v846, %v854
    %v856 = vlaneseq
    %v857 = vshrl.u32 %v856, 7
    %v858 = vsub.s32 %v304, %v857
    %v859 = vrot.slane %v849, %v858
    %v860 = vsel %vm199, %v859, %v855
    %v862 = vsel %vm314, %v860, -1e+32
    %v863 = vsel %vm561, %v862, -inf
    %864 = vmax.xlane.f32.xlu0 %v863
    %v865 = vpop.xlane.xlu0 %864
    %v866 = vsub.f32 %v862, %v865
    %v867 = vmul.f32 %v866, 1.442695
    %v868 = vpow.pop %v867
    %v869 = vsel %vm561, %v868, 0.0
    %870 = vadd.xlane.f32.xlu0 %v869
    %v871 = vpop.xlane.xlu0 %870
    %v872 = vrcp.pop %v871
    %v873 = vmul.f32 %v868, %v872
    %v874 = vlaneseq
    %v875 = vshrl.u32 %v874, 7
    %v876 = vsub.s32 0, %v875
    %v877 = vrot.slane %v873, %v876
    %879 = vbcast.lane.b32.xlu0 %v877, 256
    %v880 = vpop.permute.xlu0 %879
    %v881 = vlaneseq
    %v882 = vshrl.u32 %v881, 7
    %v883 = vsub.s32 1, %v882
    %v884 = vrot.slane %v873, %v883
    %886 = vbcast.lane.b32.xlu0 %v884, 256
    %v887 = vpop.permute.xlu0 %886
    %v888 = vmul.f32 %v880, %v212
    %v889 = vmul.f32 %v887, %v219
    %v890 = vsel %vm220, %v888, 0.0
    %v891 = vrot.slane %v890, 4
    %v892 = vadd.f32 %v890, %v891
    %v893 = vrot.slane %v892, 2
    %v894 = vadd.f32 %v892, %v893
    %v895 = vrot.slane %v894, 1
    %v896 = vadd.f32 %v894, %v895
    %v897 = vsel %vm220, %v889, 0.0
    %v898 = vrot.slane %v897, 4
    %v899 = vadd.f32 %v897, %v898
    %v900 = vrot.slane %v899, 2
    %v901 = vadd.f32 %v899, %v900
    %v902 = vrot.slane %v901, 1
    %v903 = vadd.f32 %v901, %v902
    %v904 = vadd.f32 %v605, %v896
    %v905 = vadd.f32 %v606, %v903
    %s906 = scalar_lea.vmem %s4, 64
    %v907 = vld [vmem:[%s906] sm:$0xff]
    %v908 = vld [vmem:[%s906 + $0x8] sm:$0xff]
    %v909 = vld [vmem:[%s906 + $0x10] sm:$0xff]
    %v910 = vld [vmem:[%s906 + $0x18] sm:$0xff]
    %v913 = vcombine.low %v904, %v905
    %v915 = vunpack.c.l.s4 1966171168
    %v916 = vunpack.c.0.s8 %v915
    %v917 = vlaneseq
    %v918 = vshrl.u32 %v917, 7
    %v919 = vsub.s32 %v916, %v918
    %v920 = vrot.slane %v913, %v919
    %v922 = vunpack.c.l.s4 1966171168
    %v923 = vunpack.c.0.s8 %v922
    %v924 = vlaneseq
    %v925 = vshrl.u32 %v924, 7
    %v926 = vsub.s32 %v923, %v925
    %v927 = vrot.slane %v920, %v926
    %v928 = vsel %vm220, %v927, 0
    %930 = vmatprep.subr.mxu0 0.0
    %931 = vmatpush1.msra.mxu0 0.0
    %932 = vmatprep.subr.mxu0 0.0
    %933 = vmatpush1.msra.mxu0 0.0
    %934 = vmatprep.subr.mxu0 0.0
    %935 = vmatpush1.msra.mxu0 0.0
    %936 = vmatprep.subr.mxu0 0.0
    %937 = vmatpush1.msra.mxu0 0.0
    %938 = vmatprep.subr.mxu0 0.0
    %939 = vmatpush1.msra.mxu0 0.0
    %940 = vmatprep.subr.mxu0 0.0
    %941 = vmatpush1.msra.mxu0 0.0
    %942 = vmatprep.subr.mxu0 0.0
    %943 = vmatpush1.msra.mxu0 0.0
    %944 = vmatprep.subr.mxu0 0.0
    %945 = vmatpush1.msra.mxu0 0.0
    %946 = vmatprep.subr.mxu0 0.0
    %947 = vmatpush1.msra.mxu0 0.0
    %948 = vmatprep.subr.mxu0 0.0
    %949 = vmatpush1.msra.mxu0 0.0
    %950 = vmatprep.subr.mxu0 0.0
    %951 = vmatpush1.msra.mxu0 0.0
    %952 = vmatprep.subr.mxu0 0.0
    %953 = vmatpush1.msra.mxu0 0.0
    %954 = vmatprep.subr.mxu0 0.0
    %955 = vmatpush1.msra.mxu0 %v910
    %956 = vmatprep.subr.mxu0 0.0
    %957 = vmatpush1.msra.mxu0 %v909
    %958 = vmatprep.subr.mxu0 0.0
    %959 = vmatpush1.msra.mxu0 %v908
    %960 = vmatprep.subr.mxu0 0.0
    %961 = vmatpush1.msra.mxu0 %v907
    %962 = vmatprep.subr.mxu0 0.0
    %963 = vmatpush2.msra.mxu0 0.0
    %964 = vmatprep.subr.mxu0 0.0
    %965 = vmatpush2.msra.mxu0 0.0
    %966 = vmatprep.subr.mxu0 0.0
    %967 = vmatpush2.msra.mxu0 0.0
    %968 = vmatprep.subr.mxu0 0.0
    %969 = vmatpush2.msra.mxu0 0.0
    %970 = vmatprep.subr.mxu0 0.0
    %971 = vmatpush2.msra.mxu0 0.0
    %972 = vmatprep.subr.mxu0 0.0
    %973 = vmatpush2.msra.mxu0 0.0
    %974 = vmatprep.subr.mxu0 0.0
    %975 = vmatpush2.msra.mxu0 0.0
    %976 = vmatprep.subr.mxu0 0.0
    %977 = vmatpush2.msra.mxu0 0.0
    %978 = vmatprep.subr.mxu0 0.0
    %979 = vmatpush2.msra.mxu0 0.0
    %980 = vmatprep.subr.mxu0 0.0
    %981 = vmatpush2.msra.mxu0 0.0
    %982 = vmatprep.subr.mxu0 0.0
    %983 = vmatpush2.msra.mxu0 0.0
    %984 = vmatprep.subr.mxu0 0.0
    %985 = vmatpush2.msra.mxu0 0.0
    %986 = vmatprep.subr.mxu0 0.0
    %987 = vmatpush2.msra.mxu0 0.0
    %988 = vmatprep.subr.mxu0 0.0
    %989 = vmatpush2.msra.mxu0 0.0
    %990 = vmatprep.subr.mxu0 0.0
    %991 = vmatpush2.msra.mxu0 0.0
    %992 = vmatprep.subr.mxu0 0.0
    %993 = vmatpush2.msra.mxu0 0.0
    %994 = vmatprep.mubr.f32.mxu0 0.0
    %995 = vmatmul.mubr.f32.gmra.mxu0 %v928
    %v996 = vpop.f32.mrf.mxu0
    %v997 = vadd.f32 0.0, %v996
    %v998 = vpop.f32.mrf.mxu0
    %999 = vdwg.mxu0
    %v1002 = vunpack.c.l.s4 1966171168
    %v1003 = vunpack.c.0.s8 %v1002
    %v1004 = vlaneseq
    %v1005 = vshrl.u32 %v1004, 7
    %v1006 = vsub.s32 %v1003, %v1005
    %v1007 = vrot.slane %v997, %v1006
    %v1008 = vcombine.high %v1007, %v1007
    %v1010 = vunpack.c.l.s4 1966171168
    %v1011 = vunpack.c.0.s8 %v1010
    %v1012 = vlaneseq
    %v1013 = vshrl.u32 %v1012, 7
    %v1014 = vsub.s32 %v1011, %v1013
    %v1015 = vrot.slane %v1007, %v1014
    %v1017 = vunpack.c.l.s4 1966171168
    %v1018 = vunpack.c.0.s8 %v1017
    %v1019 = vlaneseq
    %v1020 = vshrl.u32 %v1019, 7
    %v1021 = vsub.s32 %v1018, %v1020
    %v1022 = vrot.slane %v1008, %v1021
    %v1023 = vlaneseq
    %v1024 = vshrl.u32 %v1023, 7
    %v1025 = vsub.s32 0, %v1024
    %v1026 = vrot.slane %v1015, %v1025
    %v1027 = vlaneseq
    %v1028 = vshrl.u32 %v1027, 7
    %v1029 = vsub.s32 0, %v1028
    %v1030 = vrot.slane %v1022, %v1029
    %1031 = vrot.lane.b32.xlu0 %v1026, 64
    %v1032 = vpop.permute.xlu0 %1031
    %1033 = vrot.lane.b32.xlu0 %v1030, 64
    %v1034 = vpop.permute.xlu0 %1033
    %v1037 = vadd.f32 %v292, %v1032
    %v1038 = vadd.f32 %v297, %v1034
    %v1039 = vtanh.pop %v1037
    %v1040 = vtanh.pop %v1038
    %s1041 = scalar_lea.vmem %s5, 64
    %v1042 = vld [vmem:[%s1041] sm:$0xff]
    %v1043 = vld [vmem:[%s1041 + $0x8] sm:$0xff]
    %v1044 = vld [vmem:[%s1041 + $0x10] sm:$0xff]
    %v1045 = vld [vmem:[%s1041 + $0x18] sm:$0xff]
    %1048 = vrot.lane.b32.xlu0 %v1039, 64
    %v1049 = vpop.permute.xlu0 %1048
    %1050 = vrot.lane.b32.xlu0 %v1040, 64
    %v1051 = vpop.permute.xlu0 %1050
    %v1052 = vsel %vm220, %v1049, 0
    %v1054 = vsel %vm220, %v1051, 0
    %1056 = vmatprep.subr.mxu0 0.0
    %1057 = vmatpush1.msra.mxu0 0.0
    %1058 = vmatprep.subr.mxu0 0.0
    %1059 = vmatpush1.msra.mxu0 0.0
    %1060 = vmatprep.subr.mxu0 0.0
    %1061 = vmatpush1.msra.mxu0 0.0
    %1062 = vmatprep.subr.mxu0 0.0
    %1063 = vmatpush1.msra.mxu0 0.0
    %1064 = vmatprep.subr.mxu0 0.0
    %1065 = vmatpush1.msra.mxu0 0.0
    %1066 = vmatprep.subr.mxu0 0.0
    %1067 = vmatpush1.msra.mxu0 0.0
    %1068 = vmatprep.subr.mxu0 0.0
    %1069 = vmatpush1.msra.mxu0 0.0
    %1070 = vmatprep.subr.mxu0 0.0
    %1071 = vmatpush1.msra.mxu0 0.0
    %1072 = vmatprep.subr.mxu0 0.0
    %1073 = vmatpush1.msra.mxu0 0.0
    %1074 = vmatprep.subr.mxu0 0.0
    %1075 = vmatpush1.msra.mxu0 0.0
    %1076 = vmatprep.subr.mxu0 0.0
    %1077 = vmatpush1.msra.mxu0 0.0
    %1078 = vmatprep.subr.mxu0 0.0
    %1079 = vmatpush1.msra.mxu0 0.0
    %1080 = vmatprep.subr.mxu0 0.0
    %1081 = vmatpush1.msra.mxu0 %v1045
    %1082 = vmatprep.subr.mxu0 0.0
    %1083 = vmatpush1.msra.mxu0 %v1044
    %1084 = vmatprep.subr.mxu0 0.0
    %1085 = vmatpush1.msra.mxu0 %v1043
    %1086 = vmatprep.subr.mxu0 0.0
    %1087 = vmatpush1.msra.mxu0 %v1042
    %1088 = vmatprep.subr.mxu0 0.0
    %1089 = vmatpush2.msra.mxu0 0.0
    %1090 = vmatprep.subr.mxu0 0.0
    %1091 = vmatpush2.msra.mxu0 0.0
    %1092 = vmatprep.subr.mxu0 0.0
    %1093 = vmatpush2.msra.mxu0 0.0
    %1094 = vmatprep.subr.mxu0 0.0
    %1095 = vmatpush2.msra.mxu0 0.0
    %1096 = vmatprep.subr.mxu0 0.0
    %1097 = vmatpush2.msra.mxu0 0.0
    %1098 = vmatprep.subr.mxu0 0.0
    %1099 = vmatpush2.msra.mxu0 0.0
    %1100 = vmatprep.subr.mxu0 0.0
    %1101 = vmatpush2.msra.mxu0 0.0
    %1102 = vmatprep.subr.mxu0 0.0
    %1103 = vmatpush2.msra.mxu0 0.0
    %1104 = vmatprep.subr.mxu0 0.0
    %1105 = vmatpush2.msra.mxu0 0.0
    %1106 = vmatprep.subr.mxu0 0.0
    %1107 = vmatpush2.msra.mxu0 0.0
    %1108 = vmatprep.subr.mxu0 0.0
    %1109 = vmatpush2.msra.mxu0 0.0
    %1110 = vmatprep.subr.mxu0 0.0
    %1111 = vmatpush2.msra.mxu0 0.0
    %1112 = vmatprep.subr.mxu0 0.0
    %1113 = vmatpush2.msra.mxu0 0.0
    %1114 = vmatprep.subr.mxu0 0.0
    %1115 = vmatpush2.msra.mxu0 0.0
    %1116 = vmatprep.subr.mxu0 0.0
    %1117 = vmatpush2.msra.mxu0 0.0
    %1118 = vmatprep.subr.mxu0 0.0
    %1119 = vmatpush2.msra.mxu0 0.0
    %1120 = vmatprep.mubr.f32.mxu0 0.0
    %1121 = vmatmul.mubr.f32.gmra.mxu0 %v1052
    %v1122 = vpop.f32.mrf.mxu0
    %v1123 = vadd.f32 0.0, %v1122
    %v1124 = vpop.f32.mrf.mxu0
    %1125 = vmatprep.mubr.f32.mxu0 0.0
    %1126 = vmatmul.mubr.f32.gmra.mxu0 %v1054
    %v1127 = vpop.f32.mrf.mxu0
    %v1128 = vadd.f32 0.0, %v1127
    %v1129 = vpop.f32.mrf.mxu0
    %1130 = vdwg.mxu0
    %v1131 = vtanh.pop %v1123
    %v1132 = vtanh.pop %v1128
    %s1133 = scalar_lea.vmem %s6, 2
    %v1134 = vld [vmem:[%s1133] sm:$0x1]
    %v1136 = vlaneseq
    %v1137 = vshrl.u32 %v1136, 7
    %v1138 = vsub.s32 0, %v1137
    %v1139 = vrot.slane %v1134, %v1138
    %v1141 = vmul.f32 %v1131, %v1139
    %v1142 = vmul.f32 %v1132, %v1139
    %v1143 = vsel %vm541, %v1141, 0.0
    %1144 = vadd.xlane.f32.xlu0 %v1143
    %v1145 = vpop.xlane.xlu0 %1144
    %v1146 = vsel %vm541, %v1142, 0.0
    %1147 = vadd.xlane.f32.xlu0 %v1146
    %v1148 = vpop.xlane.xlu0 %1147
    %v1151 = vlaneseq
    %v1152 = vshrl.u32 %v1151, 7
    %v1153 = vsub.s32 %v304, %v1152
    %v1154 = vrot.slane %v1145, %v1153
    %v1155 = vlaneseq
    %v1156 = vshrl.u32 %v1155, 7
    %v1157 = vsub.s32 %v304, %v1156
    %v1158 = vrot.slane %v1148, %v1157
    %v1159 = vsel %vm199, %v1158, %v1154
    %v1161 = vsel %vm314, %v1159, -1e+32
    %v1162 = vsel %vm561, %v1161, -inf
    %1163 = vmax.xlane.f32.xlu0 %v1162
    %v1164 = vpop.xlane.xlu0 %1163
    %v1165 = vsub.f32 %v1161, %v1164
    %v1166 = vmul.f32 %v1165, 1.442695
    %v1167 = vpow.pop %v1166
    %v1168 = vsel %vm561, %v1167, 0.0
    %1169 = vadd.xlane.f32.xlu0 %v1168
    %v1170 = vpop.xlane.xlu0 %1169
    %v1171 = vrcp.pop %v1170
    %v1172 = vmul.f32 %v1167, %v1171
    %v1173 = vlaneseq
    %v1174 = vshrl.u32 %v1173, 7
    %v1175 = vsub.s32 0, %v1174
    %v1176 = vrot.slane %v1172, %v1175
    %1178 = vbcast.lane.b32.xlu0 %v1176, 256
    %v1179 = vpop.permute.xlu0 %1178
    %v1180 = vlaneseq
    %v1181 = vshrl.u32 %v1180, 7
    %v1182 = vsub.s32 1, %v1181
    %v1183 = vrot.slane %v1172, %v1182
    %1185 = vbcast.lane.b32.xlu0 %v1183, 256
    %v1186 = vpop.permute.xlu0 %1185
    %v1187 = vmul.f32 %v1179, %v212
    %v1188 = vmul.f32 %v1186, %v219
    %v1189 = vsel %vm220, %v1187, 0.0
    %v1190 = vrot.slane %v1189, 4
    %v1191 = vadd.f32 %v1189, %v1190
    %v1192 = vrot.slane %v1191, 2
    %v1193 = vadd.f32 %v1191, %v1192
    %v1194 = vrot.slane %v1193, 1
    %v1195 = vadd.f32 %v1193, %v1194
    %v1196 = vsel %vm220, %v1188, 0.0
    %v1197 = vrot.slane %v1196, 4
    %v1198 = vadd.f32 %v1196, %v1197
    %v1199 = vrot.slane %v1198, 2
    %v1200 = vadd.f32 %v1198, %v1199
    %v1201 = vrot.slane %v1200, 1
    %v1202 = vadd.f32 %v1200, %v1201
    %vm1203 = vcmask 253952
    %1204 = vst.msk [vmem:[#allocation4] sm:$0x1] %vm1203, %v1195
    %1205 = vst.msk [vmem:[#allocation4 + $0x1] sm:$0x1] %vm1203, %v1202
    // Predicated region
    $region26: #{tpu_custom_call.1} parent=1 // pred_check
      _
    $region27: #{tpu_custom_call.1} parent=1 // pred_check_branch
      %1207 = sbr.rel (0) target = $region29
    $region28: #{tpu_custom_call.1} parent=1 // pred_region
      %s1209 = ssub.s32 32, 32
      %1210 = vsyncadd [#allocation5], %s1209
      %s1211 = sshll.u32 [#allocation4], 4
      %s1212 = int_to_ptr.vmem [resolvable:$true] %s1211
      %1217 = dma.vmem_to_hbm [thread:$0]  %s1212, 32, %s7, [#allocation5], 16, 16, 1
    $region29: #{tpu_custom_call.1} parent=1 // pred_fallthru
      _
    // Predicated region
    $region30: #{tpu_custom_call.1} parent=1 // pred_check
      _
    $region31: #{tpu_custom_call.1} parent=1 // pred_check_branch
      %1219 = sbr.rel (0) target = $region33
    $region32: #{tpu_custom_call.1} parent=1 // pred_region
      %1220 = dma.done [#allocation5], 32
    $region33: #{tpu_custom_call.1} parent=1 // pred_fallthru
      _
    %1221 = vsyncpa [#allocation5], 1

// kernel: tpu_custom_call.1
$region0: #{tpu_custom_call.1}
  #allocation0 [shape = 'u32[]', space=smem, size = 0x4, offset = 0x4, fixed_abs, tag = 'smem constant byte address 0x4 - core index']
  #allocation1 [shape = 'u32[144,128]{1,0:T(1,128)}', space=vmem, size = 0x12000, scoped, tag = 'internal scratch']
  #allocation2 [shape = 's32[1]{0}', space=sflag, size = 0x4, scoped, tag = 'scoped memory for tpu_custom_call.1']
  #allocation3 [shape = 'u8[512]{0}', space=smem, size = 0x200, scoped, tag = 'prefetched SMEM operand 0']
  %s0 = inlined_call_operand.vmem [shape: s32[2], index: 0, kind: input, shape index: {}]
  %s1 = inlined_call_operand.vmem [shape: f32[2,8,5,32], index: 1, kind: input, shape index: {}]
  %s2 = inlined_call_operand.vmem [shape: f32[2,1,32], index: 2, kind: input, shape index: {}]
  %s3 = inlined_call_operand.vmem [shape: f32[32,96], index: 3, kind: input, shape index: {}]
  %s4 = inlined_call_operand.vmem [shape: f32[3,32,32], index: 4, kind: input, shape index: {}]
  %s5 = inlined_call_operand.vmem [shape: f32[3,32,16], index: 5, kind: input, shape index: {}]
  %s6 = inlined_call_operand.vmem [shape: f32[3,1,16], index: 6, kind: input, shape index: {}]
  %s7 = inlined_call_operand.hbm [shape: f32[2,1,32], index: 7, kind: output, shape index: {}]
  %s8 = sld [smem:[#allocation0]]
  $region34: #{tpu_custom_call.1} parent=0
    _
  %s10 = ssub.s32 1, %s8
  %s11 = scalar_select 0, %s10, %s8
  %s12 = sshll.u32 %s0, 4
  %s13 = int_to_ptr.vmem [resolvable:$true] %s12
  %15 = dma.vmem_to_smem %s13, 16, [#allocation3], [#allocation2]
  %16 = dma.done [#allocation2], 16
  %17 = sfence
  $region1: #{tpu_custom_call.1} parent=0
    #allocation4 [shape = 'u8[1024]{0}', space=vmem, size = 0x400, scoped, tag = 'output window, operand 0, single buffered']
    #allocation5 [shape = 's32[1]{0}', space=sflag, size = 0x4, scoped, tag = 'scoped memory for tpu_custom_call.1']
    %18 = vsyncpa [#allocation5], 0
    // Predicated region
    $region2: #{tpu_custom_call.1} parent=1 // pred_check
      _
    $region3: #{tpu_custom_call.1} parent=1 // pred_check_branch
      %20 = sbr.rel (0) target = $region5
    $region4: #{tpu_custom_call.1} parent=1 // pred_region
      _
    $region5: #{tpu_custom_call.1} parent=1 // pred_fallthru
      _
    // Predicated region
    $region6: #{tpu_custom_call.1} parent=1 // pred_check
      _
    $region7: #{tpu_custom_call.1} parent=1 // pred_check_branch
      %22 = sbr.rel (0) target = $region9
    $region8: #{tpu_custom_call.1} parent=1 // pred_region
      _
    $region9: #{tpu_custom_call.1} parent=1 // pred_fallthru
      _
    // Predicated region
    $region10: #{tpu_custom_call.1} parent=1 // pred_check
      _
    $region11: #{tpu_custom_call.1} parent=1 // pred_check_branch
      %24 = sbr.rel (0) target = $region13
    $region12: #{tpu_custom_call.1} parent=1 // pred_region
      _
    $region13: #{tpu_custom_call.1} parent=1 // pred_fallthru
      _
    // Predicated region
    $region14: #{tpu_custom_call.1} parent=1 // pred_check
      _
    $region15: #{tpu_custom_call.1} parent=1 // pred_check_branch
      %26 = sbr.rel (0) target = $region17
    $region16: #{tpu_custom_call.1} parent=1 // pred_region
      _
    $region17: #{tpu_custom_call.1} parent=1 // pred_fallthru
      _
    // Predicated region
    $region18: #{tpu_custom_call.1} parent=1 // pred_check
      _
    $region19: #{tpu_custom_call.1} parent=1 // pred_check_branch
      %28 = sbr.rel (0) target = $region21
    $region20: #{tpu_custom_call.1} parent=1 // pred_region
      _
    $region21: #{tpu_custom_call.1} parent=1 // pred_fallthru
      _
    // Predicated region
    $region22: #{tpu_custom_call.1} parent=1 // pred_check
      _
    $region23: #{tpu_custom_call.1} parent=1 // pred_check_branch
      %30 = sbr.rel (0) target = $region25
    $region24: #{tpu_custom_call.1} parent=1 // pred_region
      _
    $region25: #{tpu_custom_call.1} parent=1 // pred_fallthru
      _
    %v31 = vld [vmem:[%s1] sm:$0x1f]
    %v32 = vld [vmem:[%s1 + $0x8] sm:$0x1f]
    %v33 = vld [vmem:[%s1 + $0x10] sm:$0x1f]
    %v34 = vld [vmem:[%s1 + $0x18] sm:$0x1f]
    %v35 = vld [vmem:[%s1 + $0x20] sm:$0x1f]
    %v36 = vld [vmem:[%s1 + $0x28] sm:$0x1f]
    %v37 = vld [vmem:[%s1 + $0x30] sm:$0x1f]
    %v38 = vld [vmem:[%s1 + $0x38] sm:$0x1f]
    %v39 = vld [vmem:[%s1 + $0x40] sm:$0x1f]
    %v40 = vld [vmem:[%s1 + $0x48] sm:$0x1f]
    %v41 = vld [vmem:[%s1 + $0x50] sm:$0x1f]
    %v42 = vld [vmem:[%s1 + $0x58] sm:$0x1f]
    %v43 = vld [vmem:[%s1 + $0x60] sm:$0x1f]
    %v44 = vld [vmem:[%s1 + $0x68] sm:$0x1f]
    %v45 = vld [vmem:[%s1 + $0x70] sm:$0x1f]
    %v46 = vld [vmem:[%s1 + $0x78] sm:$0x1f]
    %vm47 = vcmask 258048
    %v48 = vsel %vm47, %v31, 0.0
    %v49 = vrot.slane %v48, 4
    %v50 = vadd.f32 %v48, %v49
    %v51 = vrot.slane %v50, 2
    %v52 = vadd.f32 %v50, %v51
    %v53 = vrot.slane %v52, 1
    %v54 = vadd.f32 %v52, %v53
    %v55 = vsel %vm47, %v32, 0.0
    %v56 = vrot.slane %v55, 4
    %v57 = vadd.f32 %v55, %v56
    %v58 = vrot.slane %v57, 2
    %v59 = vadd.f32 %v57, %v58
    %v60 = vrot.slane %v59, 1
    %v61 = vadd.f32 %v59, %v60
    %v62 = vsel %vm47, %v33, 0.0
    %v63 = vrot.slane %v62, 4
    %v64 = vadd.f32 %v62, %v63
    %v65 = vrot.slane %v64, 2
    %v66 = vadd.f32 %v64, %v65
    %v67 = vrot.slane %v66, 1
    %v68 = vadd.f32 %v66, %v67
    %v69 = vsel %vm47, %v34, 0.0
    %v70 = vrot.slane %v69, 4
    %v71 = vadd.f32 %v69, %v70
    %v72 = vrot.slane %v71, 2
    %v73 = vadd.f32 %v71, %v72
    %v74 = vrot.slane %v73, 1
    %v75 = vadd.f32 %v73, %v74
    %v76 = vsel %vm47, %v35, 0.0
    %v77 = vrot.slane %v76, 4
    %v78 = vadd.f32 %v76, %v77
    %v79 = vrot.slane %v78, 2
    %v80 = vadd.f32 %v78, %v79
    %v81 = vrot.slane %v80, 1
    %v82 = vadd.f32 %v80, %v81
    %v83 = vsel %vm47, %v36, 0.0
    %v84 = vrot.slane %v83, 4
    %v85 = vadd.f32 %v83, %v84
    %v86 = vrot.slane %v85, 2
    %v87 = vadd.f32 %v85, %v86
    %v88 = vrot.slane %v87, 1
    %v89 = vadd.f32 %v87, %v88
    %v90 = vsel %vm47, %v37, 0.0
    %v91 = vrot.slane %v90, 4
    %v92 = vadd.f32 %v90, %v91
    %v93 = vrot.slane %v92, 2
    %v94 = vadd.f32 %v92, %v93
    %v95 = vrot.slane %v94, 1
    %v96 = vadd.f32 %v94, %v95
    %v97 = vsel %vm47, %v38, 0.0
    %v98 = vrot.slane %v97, 4
    %v99 = vadd.f32 %v97, %v98
    %v100 = vrot.slane %v99, 2
    %v101 = vadd.f32 %v99, %v100
    %v102 = vrot.slane %v101, 1
    %v103 = vadd.f32 %v101, %v102
    %v104 = vsel %vm47, %v39, 0.0
    %v105 = vrot.slane %v104, 4
    %v106 = vadd.f32 %v104, %v105
    %v107 = vrot.slane %v106, 2
    %v108 = vadd.f32 %v106, %v107
    %v109 = vrot.slane %v108, 1
    %v110 = vadd.f32 %v108, %v109
    %v111 = vsel %vm47, %v40, 0.0
    %v112 = vrot.slane %v111, 4
    %v113 = vadd.f32 %v111, %v112
    %v114 = vrot.slane %v113, 2
    %v115 = vadd.f32 %v113, %v114
    %v116 = vrot.slane %v115, 1
    %v117 = vadd.f32 %v115, %v116
    %v118 = vsel %vm47, %v41, 0.0
    %v119 = vrot.slane %v118, 4
    %v120 = vadd.f32 %v118, %v119
    %v121 = vrot.slane %v120, 2
    %v122 = vadd.f32 %v120, %v121
    %v123 = vrot.slane %v122, 1
    %v124 = vadd.f32 %v122, %v123
    %v125 = vsel %vm47, %v42, 0.0
    %v126 = vrot.slane %v125, 4
    %v127 = vadd.f32 %v125, %v126
    %v128 = vrot.slane %v127, 2
    %v129 = vadd.f32 %v127, %v128
    %v130 = vrot.slane %v129, 1
    %v131 = vadd.f32 %v129, %v130
    %v132 = vsel %vm47, %v43, 0.0
    %v133 = vrot.slane %v132, 4
    %v134 = vadd.f32 %v132, %v133
    %v135 = vrot.slane %v134, 2
    %v136 = vadd.f32 %v134, %v135
    %v137 = vrot.slane %v136, 1
    %v138 = vadd.f32 %v136, %v137
    %v139 = vsel %vm47, %v44, 0.0
    %v140 = vrot.slane %v139, 4
    %v141 = vadd.f32 %v139, %v140
    %v142 = vrot.slane %v141, 2
    %v143 = vadd.f32 %v141, %v142
    %v144 = vrot.slane %v143, 1
    %v145 = vadd.f32 %v143, %v144
    %v146 = vsel %vm47, %v45, 0.0
    %v147 = vrot.slane %v146, 4
    %v148 = vadd.f32 %v146, %v147
    %v149 = vrot.slane %v148, 2
    %v150 = vadd.f32 %v148, %v149
    %v151 = vrot.slane %v150, 1
    %v152 = vadd.f32 %v150, %v151
    %v153 = vsel %vm47, %v46, 0.0
    %v154 = vrot.slane %v153, 4
    %v155 = vadd.f32 %v153, %v154
    %v156 = vrot.slane %v155, 2
    %v157 = vadd.f32 %v155, %v156
    %v158 = vrot.slane %v157, 1
    %v159 = vadd.f32 %v157, %v158
    %v160 = vrcp.pop 5.0
    %v161 = vmul.f32 %v54, %v160
    %v162 = vmul.f32 %v61, %v160
    %v163 = vmul.f32 %v68, %v160
    %v164 = vmul.f32 %v75, %v160
    %v165 = vmul.f32 %v82, %v160
    %v166 = vmul.f32 %v89, %v160
    %v167 = vmul.f32 %v96, %v160
    %v168 = vmul.f32 %v103, %v160
    %v169 = vmul.f32 %v110, %v160
    %v170 = vmul.f32 %v117, %v160
    %v171 = vmul.f32 %v124, %v160
    %v172 = vmul.f32 %v131, %v160
    %v173 = vmul.f32 %v138, %v160
    %v174 = vmul.f32 %v145, %v160
    %v175 = vmul.f32 %v152, %v160
    %v176 = vmul.f32 %v159, %v160
    %v177 = vld [vmem:[%s2] sm:$0x1]
    %v178 = vld [vmem:[%s2 + $0x1] sm:$0x1]
    %v179 = vld [vmem:[%s3] sm:$0xff]
    %v180 = vld [vmem:[%s3 + $0x8] sm:$0xff]
    %v181 = vld [vmem:[%s3 + $0x10] sm:$0xff]
    %v182 = vld [vmem:[%s3 + $0x18] sm:$0xff]
    %vm199 = vcmask 1041409
    %v200 = vsel %vm199, %v162, %v161
    %vm201 = vcmask 1042434
    %v202 = vsel %vm201, %v163, %v200
    %vm203 = vcmask 1043459
    %v204 = vsel %vm203, %v164, %v202
    %vm205 = vcmask 1044484
    %v206 = vsel %vm205, %v165, %v204
    %vm207 = vcmask 1045509
    %v208 = vsel %vm207, %v166, %v206
    %vm209 = vcmask 1046534
    %v210 = vsel %vm209, %v167, %v208
    %vm211 = vcmask 1047559
    %v212 = vsel %vm211, %v168, %v210
    %v213 = vsel %vm199, %v170, %v169
    %v214 = vsel %vm201, %v171, %v213
    %v215 = vsel %vm203, %v172, %v214
    %v216 = vsel %vm205, %v173, %v215
    %v217 = vsel %vm207, %v174, %v216
    %v218 = vsel %vm209, %v175, %v217
    %v219 = vsel %vm211, %v176, %v218
    %vm220 = vcmask 261120
    %v221 = vsel %vm220, %v212, 0
    %v223 = vsel %vm220, %v219, 0
    %225 = vmatprep.subr.mxu0 0.0
    %226 = vmatpush1.msra.mxu0 0.0
    %227 = vmatprep.subr.mxu0 0.0
    %228 = vmatpush1.msra.mxu0 0.0
    %229 = vmatprep.subr.mxu0 0.0
    %230 = vmatpush1.msra.mxu0 0.0
    %231 = vmatprep.subr.mxu0 0.0
    %232 = vmatpush1.msra.mxu0 0.0
    %233 = vmatprep.subr.mxu0 0.0
    %234 = vmatpush1.msra.mxu0 0.0
    %235 = vmatprep.subr.mxu0 0.0
    %236 = vmatpush1.msra.mxu0 0.0
    %237 = vmatprep.subr.mxu0 0.0
    %238 = vmatpush1.msra.mxu0 0.0
    %239 = vmatprep.subr.mxu0 0.0
    %240 = vmatpush1.msra.mxu0 0.0
    %241 = vmatprep.subr.mxu0 0.0
    %242 = vmatpush1.msra.mxu0 0.0
    %243 = vmatprep.subr.mxu0 0.0
    %244 = vmatpush1.msra.mxu0 0.0
    %245 = vmatprep.subr.mxu0 0.0
    %246 = vmatpush1.msra.mxu0 0.0
    %247 = vmatprep.subr.mxu0 0.0
    %248 = vmatpush1.msra.mxu0 0.0
    %249 = vmatprep.subr.mxu0 0.0
    %250 = vmatpush1.msra.mxu0 %v182
    %251 = vmatprep.subr.mxu0 0.0
    %252 = vmatpush1.msra.mxu0 %v181
    %253 = vmatprep.subr.mxu0 0.0
    %254 = vmatpush1.msra.mxu0 %v180
    %255 = vmatprep.subr.mxu0 0.0
    %256 = vmatpush1.msra.mxu0 %v179
    %257 = vmatprep.subr.mxu0 0.0
    %258 = vmatpush2.msra.mxu0 0.0
    %259 = vmatprep.subr.mxu0 0.0
    %260 = vmatpush2.msra.mxu0 0.0
    %261 = vmatprep.subr.mxu0 0.0
    %262 = vmatpush2.msra.mxu0 0.0
    %263 = vmatprep.subr.mxu0 0.0
    %264 = vmatpush2.msra.mxu0 0.0
    %265 = vmatprep.subr.mxu0 0.0
    %266 = vmatpush2.msra.mxu0 0.0
    %267 = vmatprep.subr.mxu0 0.0
    %268 = vmatpush2.msra.mxu0 0.0
    %269 = vmatprep.subr.mxu0 0.0
    %270 = vmatpush2.msra.mxu0 0.0
    %271 = vmatprep.subr.mxu0 0.0
    %272 = vmatpush2.msra.mxu0 0.0
    %273 = vmatprep.subr.mxu0 0.0
    %274 = vmatpush2.msra.mxu0 0.0
    %275 = vmatprep.subr.mxu0 0.0
    %276 = vmatpush2.msra.mxu0 0.0
    %277 = vmatprep.subr.mxu0 0.0
    %278 = vmatpush2.msra.mxu0 0.0
    %279 = vmatprep.subr.mxu0 0.0
    %280 = vmatpush2.msra.mxu0 0.0
    %281 = vmatprep.subr.mxu0 0.0
    %282 = vmatpush2.msra.mxu0 0.0
    %283 = vmatprep.subr.mxu0 0.0
    %284 = vmatpush2.msra.mxu0 0.0
    %285 = vmatprep.subr.mxu0 0.0
    %286 = vmatpush2.msra.mxu0 0.0
    %287 = vmatprep.subr.mxu0 0.0
    %288 = vmatpush2.msra.mxu0 0.0
    %289 = vmatprep.mubr.f32.mxu0 0.0
    %290 = vmatmul.mubr.f32.gmra.mxu0 %v221
    %v291 = vpop.f32.mrf.mxu0
    %v292 = vadd.f32 0.0, %v291
    %v293 = vpop.f32.mrf.mxu0
    %294 = vmatprep.mubr.f32.mxu0 0.0
    %295 = vmatmul.mubr.f32.gmra.mxu0 %v223
    %v296 = vpop.f32.mrf.mxu0
    %v297 = vadd.f32 0.0, %v296
    %v298 = vpop.f32.mrf.mxu0
    %299 = vdwg.mxu0
    %s300 = smul.u32 0, 2
    %v301 = vlaneseq
    %v302 = vshrl.u32 %v301, 7
    %v303 = vlaneseq
    %v304 = vand.u32 %v303, 127
    %vm305 = vcmp.eq.s32.totalorder %v302, 0
    %s306 = sld [smem:[#allocation3 + %s300]]
    %v307 = vstv %s306
    %v308 = vsel %vm305, %v307, 0
    %vm309 = vcmp.eq.s32.totalorder %v302, 1
    %s310 = sadd.s32 %s300, 1
    %s311 = sld [smem:[#allocation3 + %s310]]
    %v312 = vstv %s311
    %v313 = vsel %vm309, %v312, %v308
    %vm314 = vcmp.lt.s32.totalorder %v304, %v313
    %v315 = vld [vmem:[%s4] sm:$0xff]
    %v316 = vld [vmem:[%s4 + $0x8] sm:$0xff]
    %v317 = vld [vmem:[%s4 + $0x10] sm:$0xff]
    %v318 = vld [vmem:[%s4 + $0x18] sm:$0xff]
    %v321 = vcombine.low %v177, %v178
    %v323 = vunpack.c.l.s4 1966171168
    %v324 = vunpack.c.0.s8 %v323
    %v325 = vlaneseq
    %v326 = vshrl.u32 %v325, 7
    %v327 = vsub.s32 %v324, %v326
    %v328 = vrot.slane %v321, %v327
    %v330 = vunpack.c.l.s4 1966171168
    %v331 = vunpack.c.0.s8 %v330
    %v332 = vlaneseq
    %v333 = vshrl.u32 %v332, 7
    %v334 = vsub.s32 %v331, %v333
    %v335 = vrot.slane %v328, %v334
    %v336 = vsel %vm220, %v335, 0
    %338 = vmatprep.subr.mxu0 0.0
    %339 = vmatpush1.msra.mxu0 0.0
    %340 = vmatprep.subr.mxu0 0.0
    %341 = vmatpush1.msra.mxu0 0.0
    %342 = vmatprep.subr.mxu0 0.0
    %343 = vmatpush1.msra.mxu0 0.0
    %344 = vmatprep.subr.mxu0 0.0
    %345 = vmatpush1.msra.mxu0 0.0
    %346 = vmatprep.subr.mxu0 0.0
    %347 = vmatpush1.msra.mxu0 0.0
    %348 = vmatprep.subr.mxu0 0.0
    %349 = vmatpush1.msra.mxu0 0.0
    %350 = vmatprep.subr.mxu0 0.0
    %351 = vmatpush1.msra.mxu0 0.0
    %352 = vmatprep.subr.mxu0 0.0
    %353 = vmatpush1.msra.mxu0 0.0
    %354 = vmatprep.subr.mxu0 0.0
    %355 = vmatpush1.msra.mxu0 0.0
    %356 = vmatprep.subr.mxu0 0.0
    %357 = vmatpush1.msra.mxu0 0.0
    %358 = vmatprep.subr.mxu0 0.0
    %359 = vmatpush1.msra.mxu0 0.0
    %360 = vmatprep.subr.mxu0 0.0
    %361 = vmatpush1.msra.mxu0 0.0
    %362 = vmatprep.subr.mxu0 0.0
    %363 = vmatpush1.msra.mxu0 %v318
    %364 = vmatprep.subr.mxu0 0.0
    %365 = vmatpush1.msra.mxu0 %v317
    %366 = vmatprep.subr.mxu0 0.0
    %367 = vmatpush1.msra.mxu0 %v316
    %368 = vmatprep.subr.mxu0 0.0
    %369 = vmatpush1.msra.mxu0 %v315
    %370 = vmatprep.subr.mxu0 0.0
    %371 = vmatpush2.msra.mxu0 0.0
    %372 = vmatprep.subr.mxu0 0.0
    %373 = vmatpush2.msra.mxu0 0.0
    %374 = vmatprep.subr.mxu0 0.0
    %375 = vmatpush2.msra.mxu0 0.0
    %376 = vmatprep.subr.mxu0 0.0
    %377 = vmatpush2.msra.mxu0 0.0
    %378 = vmatprep.subr.mxu0 0.0
    %379 = vmatpush2.msra.mxu0 0.0
    %380 = vmatprep.subr.mxu0 0.0
    %381 = vmatpush2.msra.mxu0 0.0
    %382 = vmatprep.subr.mxu0 0.0
    %383 = vmatpush2.msra.mxu0 0.0
    %384 = vmatprep.subr.mxu0 0.0
    %385 = vmatpush2.msra.mxu0 0.0
    %386 = vmatprep.subr.mxu0 0.0
    %387 = vmatpush2.msra.mxu0 0.0
    %388 = vmatprep.subr.mxu0 0.0
    %389 = vmatpush2.msra.mxu0 0.0
    %390 = vmatprep.subr.mxu0 0.0
    %391 = vmatpush2.msra.mxu0 0.0
    %392 = vmatprep.subr.mxu0 0.0
    %393 = vmatpush2.msra.mxu0 0.0
    %394 = vmatprep.subr.mxu0 0.0
    %395 = vmatpush2.msra.mxu0 0.0
    %396 = vmatprep.subr.mxu0 0.0
    %397 = vmatpush2.msra.mxu0 0.0
    %398 = vmatprep.subr.mxu0 0.0
    %399 = vmatpush2.msra.mxu0 0.0
    %400 = vmatprep.subr.mxu0 0.0
    %401 = vmatpush2.msra.mxu0 0.0
    %402 = vmatprep.mubr.f32.mxu0 0.0
    %403 = vmatmul.mubr.f32.gmra.mxu0 %v336
    %v404 = vpop.f32.mrf.mxu0
    %v405 = vadd.f32 0.0, %v404
    %v406 = vpop.f32.mrf.mxu0
    %407 = vdwg.mxu0
    %v410 = vunpack.c.l.s4 1966171168
    %v411 = vunpack.c.0.s8 %v410
    %v412 = vlaneseq
    %v413 = vshrl.u32 %v412, 7
    %v414 = vsub.s32 %v411, %v413
    %v415 = vrot.slane %v405, %v414
    %v416 = vcombine.high %v415, %v415
    %v418 = vunpack.c.l.s4 1966171168
    %v419 = vunpack.c.0.s8 %v418
    %v420 = vlaneseq
    %v421 = vshrl.u32 %v420, 7
    %v422 = vsub.s32 %v419, %v421
    %v423 = vrot.slane %v415, %v422
    %v425 = vunpack.c.l.s4 1966171168
    %v426 = vunpack.c.0.s8 %v425
    %v427 = vlaneseq
    %v428 = vshrl.u32 %v427, 7
    %v429 = vsub.s32 %v426, %v428
    %v430 = vrot.slane %v416, %v429
    %v431 = vlaneseq
    %v432 = vshrl.u32 %v431, 7
    %v433 = vsub.s32 0, %v432
    %v434 = vrot.slane %v423, %v433
    %v435 = vlaneseq
    %v436 = vshrl.u32 %v435, 7
    %v437 = vsub.s32 0, %v436
    %v438 = vrot.slane %v430, %v437
    %v441 = vadd.f32 %v292, %v434
    %v442 = vadd.f32 %v297, %v438
    %v443 = vtanh.pop %v441
    %v444 = vtanh.pop %v442
    %v445 = vld [vmem:[%s5] sm:$0xff]
    %v446 = vld [vmem:[%s5 + $0x8] sm:$0xff]
    %v447 = vld [vmem:[%s5 + $0x10] sm:$0xff]
    %v448 = vld [vmem:[%s5 + $0x18] sm:$0xff]
    %v450 = vsel %vm220, %v443, 0
    %v453 = vsel %vm220, %v444, 0
    %455 = vmatprep.subr.mxu0 0.0
    %456 = vmatpush1.msra.mxu0 0.0
    %457 = vmatprep.subr.mxu0 0.0
    %458 = vmatpush1.msra.mxu0 0.0
    %459 = vmatprep.subr.mxu0 0.0
    %460 = vmatpush1.msra.mxu0 0.0
    %461 = vmatprep.subr.mxu0 0.0
    %462 = vmatpush1.msra.mxu0 0.0
    %463 = vmatprep.subr.mxu0 0.0
    %464 = vmatpush1.msra.mxu0 0.0
    %465 = vmatprep.subr.mxu0 0.0
    %466 = vmatpush1.msra.mxu0 0.0
    %467 = vmatprep.subr.mxu0 0.0
    %468 = vmatpush1.msra.mxu0 0.0
    %469 = vmatprep.subr.mxu0 0.0
    %470 = vmatpush1.msra.mxu0 0.0
    %471 = vmatprep.subr.mxu0 0.0
    %472 = vmatpush1.msra.mxu0 0.0
    %473 = vmatprep.subr.mxu0 0.0
    %474 = vmatpush1.msra.mxu0 0.0
    %475 = vmatprep.subr.mxu0 0.0
    %476 = vmatpush1.msra.mxu0 0.0
    %477 = vmatprep.subr.mxu0 0.0
    %478 = vmatpush1.msra.mxu0 0.0
    %479 = vmatprep.subr.mxu0 0.0
    %480 = vmatpush1.msra.mxu0 %v448
    %481 = vmatprep.subr.mxu0 0.0
    %482 = vmatpush1.msra.mxu0 %v447
    %483 = vmatprep.subr.mxu0 0.0
    %484 = vmatpush1.msra.mxu0 %v446
    %485 = vmatprep.subr.mxu0 0.0
    %486 = vmatpush1.msra.mxu0 %v445
    %487 = vmatprep.subr.mxu0 0.0
    %488 = vmatpush2.msra.mxu0 0.0
    %489 = vmatprep.subr.mxu0 0.0
    %490 = vmatpush2.msra.mxu0 0.0
    %491 = vmatprep.subr.mxu0 0.0
    %492 = vmatpush2.msra.mxu0 0.0
    %493 = vmatprep.subr.mxu0 0.0
    %494 = vmatpush2.msra.mxu0 0.0
    %495 = vmatprep.subr.mxu0 0.0
    %496 = vmatpush2.msra.mxu0 0.0
    %497 = vmatprep.subr.mxu0 0.0
    %498 = vmatpush2.msra.mxu0 0.0
    %499 = vmatprep.subr.mxu0 0.0
    %500 = vmatpush2.msra.mxu0 0.0
    %501 = vmatprep.subr.mxu0 0.0
    %502 = vmatpush2.msra.mxu0 0.0
    %503 = vmatprep.subr.mxu0 0.0
    %504 = vmatpush2.msra.mxu0 0.0
    %505 = vmatprep.subr.mxu0 0.0
    %506 = vmatpush2.msra.mxu0 0.0
    %507 = vmatprep.subr.mxu0 0.0
    %508 = vmatpush2.msra.mxu0 0.0
    %509 = vmatprep.subr.mxu0 0.0
    %510 = vmatpush2.msra.mxu0 0.0
    %511 = vmatprep.subr.mxu0 0.0
    %512 = vmatpush2.msra.mxu0 0.0
    %513 = vmatprep.subr.mxu0 0.0
    %514 = vmatpush2.msra.mxu0 0.0
    %515 = vmatprep.subr.mxu0 0.0
    %516 = vmatpush2.msra.mxu0 0.0
    %517 = vmatprep.subr.mxu0 0.0
    %518 = vmatpush2.msra.mxu0 0.0
    %519 = vmatprep.mubr.f32.mxu0 0.0
    %520 = vmatmul.mubr.f32.gmra.mxu0 %v450
    %v521 = vpop.f32.mrf.mxu0
    %v522 = vadd.f32 0.0, %v521
    %v523 = vpop.f32.mrf.mxu0
    %524 = vmatprep.mubr.f32.mxu0 0.0
    %525 = vmatmul.mubr.f32.gmra.mxu0 %v453
    %v526 = vpop.f32.mrf.mxu0
    %v527 = vadd.f32 0.0, %v526
    %v528 = vpop.f32.mrf.mxu0
    %529 = vdwg.mxu0
    %v530 = vtanh.pop %v522
    %v531 = vtanh.pop %v527
    %v532 = vld [vmem:[%s6] sm:$0x1]
    %v534 = vlaneseq
    %v535 = vshrl.u32 %v534, 7
    %v536 = vsub.s32 0, %v535
    %v537 = vrot.slane %v532, %v536
    %v539 = vmul.f32 %v530, %v537
    %v540 = vmul.f32 %v531, %v537
    %vm541 = vcmask 130048
    %v542 = vsel %vm541, %v539, 0.0
    %543 = vadd.xlane.f32.xlu0 %v542
    %v544 = vpop.xlane.xlu0 %543
    %v545 = vsel %vm541, %v540, 0.0
    %546 = vadd.xlane.f32.xlu0 %v545
    %v547 = vpop.xlane.xlu0 %546
    %v550 = vlaneseq
    %v551 = vshrl.u32 %v550, 7
    %v552 = vsub.s32 %v304, %v551
    %v553 = vrot.slane %v544, %v552
    %v554 = vlaneseq
    %v555 = vshrl.u32 %v554, 7
    %v556 = vsub.s32 %v304, %v555
    %v557 = vrot.slane %v547, %v556
    %v558 = vsel %vm199, %v557, %v553
    %v560 = vsel %vm314, %v558, -1e+32
    %vm561 = vcmask 58368
    %v562 = vsel %vm561, %v560, -inf
    %563 = vmax.xlane.f32.xlu0 %v562
    %v564 = vpop.xlane.xlu0 %563
    %v565 = vsub.f32 %v560, %v564
    %v566 = vmul.f32 %v565, 1.442695
    %v567 = vpow.pop %v566
    %v568 = vsel %vm561, %v567, 0.0
    %569 = vadd.xlane.f32.xlu0 %v568
    %v570 = vpop.xlane.xlu0 %569
    %v571 = vrcp.pop %v570
    %v572 = vmul.f32 %v567, %v571
    %v573 = vlaneseq
    %v574 = vshrl.u32 %v573, 7
    %v575 = vsub.s32 0, %v574
    %v576 = vrot.slane %v572, %v575
    %578 = vbcast.lane.b32.xlu0 %v576, 256
    %v579 = vpop.permute.xlu0 %578
    %v580 = vlaneseq
    %v581 = vshrl.u32 %v580, 7
    %v582 = vsub.s32 1, %v581
    %v583 = vrot.slane %v572, %v582
    %585 = vbcast.lane.b32.xlu0 %v583, 256
    %v586 = vpop.permute.xlu0 %585
    %v589 = vmul.f32 %v579, %v212
    %v590 = vmul.f32 %v586, %v219
    %v591 = vsel %vm220, %v589, 0.0
    %v592 = vrot.slane %v591, 4
    %v593 = vadd.f32 %v591, %v592
    %v594 = vrot.slane %v593, 2
    %v595 = vadd.f32 %v593, %v594
    %v596 = vrot.slane %v595, 1
    %v597 = vadd.f32 %v595, %v596
    %v598 = vsel %vm220, %v590, 0.0
    %v599 = vrot.slane %v598, 4
    %v600 = vadd.f32 %v598, %v599
    %v601 = vrot.slane %v600, 2
    %v602 = vadd.f32 %v600, %v601
    %v603 = vrot.slane %v602, 1
    %v604 = vadd.f32 %v602, %v603
    %v605 = vadd.f32 %v177, %v597
    %v606 = vadd.f32 %v178, %v604
    %s607 = scalar_lea.vmem %s4, 32
    %v608 = vld [vmem:[%s607] sm:$0xff]
    %v609 = vld [vmem:[%s607 + $0x8] sm:$0xff]
    %v610 = vld [vmem:[%s607 + $0x10] sm:$0xff]
    %v611 = vld [vmem:[%s607 + $0x18] sm:$0xff]
    %v614 = vcombine.low %v605, %v606
    %v616 = vunpack.c.l.s4 1966171168
    %v617 = vunpack.c.0.s8 %v616
    %v618 = vlaneseq
    %v619 = vshrl.u32 %v618, 7
    %v620 = vsub.s32 %v617, %v619
    %v621 = vrot.slane %v614, %v620
    %v623 = vunpack.c.l.s4 1966171168
    %v624 = vunpack.c.0.s8 %v623
    %v625 = vlaneseq
    %v626 = vshrl.u32 %v625, 7
    %v627 = vsub.s32 %v624, %v626
    %v628 = vrot.slane %v621, %v627
    %v629 = vsel %vm220, %v628, 0
    %631 = vmatprep.subr.mxu0 0.0
    %632 = vmatpush1.msra.mxu0 0.0
    %633 = vmatprep.subr.mxu0 0.0
    %634 = vmatpush1.msra.mxu0 0.0
    %635 = vmatprep.subr.mxu0 0.0
    %636 = vmatpush1.msra.mxu0 0.0
    %637 = vmatprep.subr.mxu0 0.0
    %638 = vmatpush1.msra.mxu0 0.0
    %639 = vmatprep.subr.mxu0 0.0
    %640 = vmatpush1.msra.mxu0 0.0
    %641 = vmatprep.subr.mxu0 0.0
    %642 = vmatpush1.msra.mxu0 0.0
    %643 = vmatprep.subr.mxu0 0.0
    %644 = vmatpush1.msra.mxu0 0.0
    %645 = vmatprep.subr.mxu0 0.0
    %646 = vmatpush1.msra.mxu0 0.0
    %647 = vmatprep.subr.mxu0 0.0
    %648 = vmatpush1.msra.mxu0 0.0
    %649 = vmatprep.subr.mxu0 0.0
    %650 = vmatpush1.msra.mxu0 0.0
    %651 = vmatprep.subr.mxu0 0.0
    %652 = vmatpush1.msra.mxu0 0.0
    %653 = vmatprep.subr.mxu0 0.0
    %654 = vmatpush1.msra.mxu0 0.0
    %655 = vmatprep.subr.mxu0 0.0
    %656 = vmatpush1.msra.mxu0 %v611
    %657 = vmatprep.subr.mxu0 0.0
    %658 = vmatpush1.msra.mxu0 %v610
    %659 = vmatprep.subr.mxu0 0.0
    %660 = vmatpush1.msra.mxu0 %v609
    %661 = vmatprep.subr.mxu0 0.0
    %662 = vmatpush1.msra.mxu0 %v608
    %663 = vmatprep.subr.mxu0 0.0
    %664 = vmatpush2.msra.mxu0 0.0
    %665 = vmatprep.subr.mxu0 0.0
    %666 = vmatpush2.msra.mxu0 0.0
    %667 = vmatprep.subr.mxu0 0.0
    %668 = vmatpush2.msra.mxu0 0.0
    %669 = vmatprep.subr.mxu0 0.0
    %670 = vmatpush2.msra.mxu0 0.0
    %671 = vmatprep.subr.mxu0 0.0
    %672 = vmatpush2.msra.mxu0 0.0
    %673 = vmatprep.subr.mxu0 0.0
    %674 = vmatpush2.msra.mxu0 0.0
    %675 = vmatprep.subr.mxu0 0.0
    %676 = vmatpush2.msra.mxu0 0.0
    %677 = vmatprep.subr.mxu0 0.0
    %678 = vmatpush2.msra.mxu0 0.0
    %679 = vmatprep.subr.mxu0 0.0
    %680 = vmatpush2.msra.mxu0 0.0
    %681 = vmatprep.subr.mxu0 0.0
    %682 = vmatpush2.msra.mxu0 0.0
    %683 = vmatprep.subr.mxu0 0.0
    %684 = vmatpush2.msra.mxu0 0.0
    %685 = vmatprep.subr.mxu0 0.0
    %686 = vmatpush2.msra.mxu0 0.0
    %687 = vmatprep.subr.mxu0 0.0
    %688 = vmatpush2.msra.mxu0 0.0
    %689 = vmatprep.subr.mxu0 0.0
    %690 = vmatpush2.msra.mxu0 0.0
    %691 = vmatprep.subr.mxu0 0.0
    %692 = vmatpush2.msra.mxu0 0.0
    %693 = vmatprep.subr.mxu0 0.0
    %694 = vmatpush2.msra.mxu0 0.0
    %695 = vmatprep.mubr.f32.mxu0 0.0
    %696 = vmatmul.mubr.f32.gmra.mxu0 %v629
    %v697 = vpop.f32.mrf.mxu0
    %v698 = vadd.f32 0.0, %v697
    %v699 = vpop.f32.mrf.mxu0
    %700 = vdwg.mxu0
    %v703 = vunpack.c.l.s4 1966171168
    %v704 = vunpack.c.0.s8 %v703
    %v705 = vlaneseq
    %v706 = vshrl.u32 %v705, 7
    %v707 = vsub.s32 %v704, %v706
    %v708 = vrot.slane %v698, %v707
    %v709 = vcombine.high %v708, %v708
    %v711 = vunpack.c.l.s4 1966171168
    %v712 = vunpack.c.0.s8 %v711
    %v713 = vlaneseq
    %v714 = vshrl.u32 %v713, 7
    %v715 = vsub.s32 %v712, %v714
    %v716 = vrot.slane %v708, %v715
    %v718 = vunpack.c.l.s4 1966171168
    %v719 = vunpack.c.0.s8 %v718
    %v720 = vlaneseq
    %v721 = vshrl.u32 %v720, 7
    %v722 = vsub.s32 %v719, %v721
    %v723 = vrot.slane %v709, %v722
    %v724 = vlaneseq
    %v725 = vshrl.u32 %v724, 7
    %v726 = vsub.s32 0, %v725
    %v727 = vrot.slane %v716, %v726
    %v728 = vlaneseq
    %v729 = vshrl.u32 %v728, 7
    %v730 = vsub.s32 0, %v729
    %v731 = vrot.slane %v723, %v730
    %732 = vrot.lane.b32.xlu0 %v727, 32
    %v733 = vpop.permute.xlu0 %732
    %734 = vrot.lane.b32.xlu0 %v731, 32
    %v735 = vpop.permute.xlu0 %734
    %v738 = vadd.f32 %v292, %v733
    %v739 = vadd.f32 %v297, %v735
    %v740 = vtanh.pop %v738
    %v741 = vtanh.pop %v739
    %s742 = scalar_lea.vmem %s5, 32
    %v743 = vld [vmem:[%s742] sm:$0xff]
    %v744 = vld [vmem:[%s742 + $0x8] sm:$0xff]
    %v745 = vld [vmem:[%s742 + $0x10] sm:$0xff]
    %v746 = vld [vmem:[%s742 + $0x18] sm:$0xff]
    %749 = vrot.lane.b32.xlu0 %v740, 96
    %v750 = vpop.permute.xlu0 %749
    %751 = vrot.lane.b32.xlu0 %v741, 96
    %v752 = vpop.permute.xlu0 %751
    %v753 = vsel %vm220, %v750, 0
    %v755 = vsel %vm220, %v752, 0
    %757 = vmatprep.subr.mxu0 0.0
    %758 = vmatpush1.msra.mxu0 0.0
    %759 = vmatprep.subr.mxu0 0.0
    %760 = vmatpush1.msra.mxu0 0.0
    %761 = vmatprep.subr.mxu0 0.0
    %762 = vmatpush1.msra.mxu0 0.0
    %763 = vmatprep.subr.mxu0 0.0
    %764 = vmatpush1.msra.mxu0 0.0
    %765 = vmatprep.subr.mxu0 0.0
    %766 = vmatpush1.msra.mxu0 0.0
    %767 = vmatprep.subr.mxu0 0.0
    %768 = vmatpush1.msra.mxu0 0.0
    %769 = vmatprep.subr.mxu0 0.0
    %770 = vmatpush1.msra.mxu0 0.0
    %771 = vmatprep.subr.mxu0 0.0
    %772 = vmatpush1.msra.mxu0 0.0
    %773 = vmatprep.subr.mxu0 0.0
    %774 = vmatpush1.msra.mxu0 0.0
    %775 = vmatprep.subr.mxu0 0.0
    %776 = vmatpush1.msra.mxu0 0.0
    %777 = vmatprep.subr.mxu0 0.0
    %778 = vmatpush1.msra.mxu0 0.0
    %779 = vmatprep.subr.mxu0 0.0
    %780 = vmatpush1.msra.mxu0 0.0
    %781 = vmatprep.subr.mxu0 0.0
    %782 = vmatpush1.msra.mxu0 %v746
    %783 = vmatprep.subr.mxu0 0.0
    %784 = vmatpush1.msra.mxu0 %v745
    %785 = vmatprep.subr.mxu0 0.0
    %786 = vmatpush1.msra.mxu0 %v744
    %787 = vmatprep.subr.mxu0 0.0
    %788 = vmatpush1.msra.mxu0 %v743
    %789 = vmatprep.subr.mxu0 0.0
    %790 = vmatpush2.msra.mxu0 0.0
    %791 = vmatprep.subr.mxu0 0.0
    %792 = vmatpush2.msra.mxu0 0.0
    %793 = vmatprep.subr.mxu0 0.0
    %794 = vmatpush2.msra.mxu0 0.0
    %795 = vmatprep.subr.mxu0 0.0
    %796 = vmatpush2.msra.mxu0 0.0
    %797 = vmatprep.subr.mxu0 0.0
    %798 = vmatpush2.msra.mxu0 0.0
    %799 = vmatprep.subr.mxu0 0.0
    %800 = vmatpush2.msra.mxu0 0.0
    %801 = vmatprep.subr.mxu0 0.0
    %802 = vmatpush2.msra.mxu0 0.0
    %803 = vmatprep.subr.mxu0 0.0
    %804 = vmatpush2.msra.mxu0 0.0
    %805 = vmatprep.subr.mxu0 0.0
    %806 = vmatpush2.msra.mxu0 0.0
    %807 = vmatprep.subr.mxu0 0.0
    %808 = vmatpush2.msra.mxu0 0.0
    %809 = vmatprep.subr.mxu0 0.0
    %810 = vmatpush2.msra.mxu0 0.0
    %811 = vmatprep.subr.mxu0 0.0
    %812 = vmatpush2.msra.mxu0 0.0
    %813 = vmatprep.subr.mxu0 0.0
    %814 = vmatpush2.msra.mxu0 0.0
    %815 = vmatprep.subr.mxu0 0.0
    %816 = vmatpush2.msra.mxu0 0.0
    %817 = vmatprep.subr.mxu0 0.0
    %818 = vmatpush2.msra.mxu0 0.0
    %819 = vmatprep.subr.mxu0 0.0
    %820 = vmatpush2.msra.mxu0 0.0
    %821 = vmatprep.mubr.f32.mxu0 0.0
    %822 = vmatmul.mubr.f32.gmra.mxu0 %v753
    %v823 = vpop.f32.mrf.mxu0
    %v824 = vadd.f32 0.0, %v823
    %v825 = vpop.f32.mrf.mxu0
    %826 = vmatprep.mubr.f32.mxu0 0.0
    %827 = vmatmul.mubr.f32.gmra.mxu0 %v755
    %v828 = vpop.f32.mrf.mxu0
    %v829 = vadd.f32 0.0, %v828
    %v830 = vpop.f32.mrf.mxu0
    %831 = vdwg.mxu0
    %v832 = vtanh.pop %v824
    %v833 = vtanh.pop %v829
    %s834 = scalar_lea.vmem %s6, 1
    %v835 = vld [vmem:[%s834] sm:$0x1]
    %v837 = vlaneseq
    %v838 = vshrl.u32 %v837, 7
    %v839 = vsub.s32 0, %v838
    %v840 = vrot.slane %v835, %v839
    %v842 = vmul.f32 %v832, %v840
    %v843 = vmul.f32 %v833, %v840
    %v844 = vsel %vm541, %v842, 0.0
    %845 = vadd.xlane.f32.xlu0 %v844
    %v846 = vpop.xlane.xlu0 %845
    %v847 = vsel %vm541, %v843, 0.0
    %848 = vadd.xlane.f32.xlu0 %v847
    %v849 = vpop.xlane.xlu0 %848
    %v852 = vlaneseq
    %v853 = vshrl.u32 %v852, 7
    %v854 = vsub.s32 %v304, %v853
    %v855 = vrot.slane %v846, %v854
    %v856 = vlaneseq
    %v857 = vshrl.u32 %v856, 7
    %v858 = vsub.s32 %v304, %v857
    %v859 = vrot.slane %v849, %v858
    %v860 = vsel %vm199, %v859, %v855
    %v862 = vsel %vm314, %v860, -1e+32
    %v863 = vsel %vm561, %v862, -inf
    %864 = vmax.xlane.f32.xlu0 %v863
    %v865 = vpop.xlane.xlu0 %864
    %v866 = vsub.f32 %v862, %v865
    %v867 = vmul.f32 %v866, 1.442695
    %v868 = vpow.pop %v867
    %v869 = vsel %vm561, %v868, 0.0
    %870 = vadd.xlane.f32.xlu0 %v869
    %v871 = vpop.xlane.xlu0 %870
    %v872 = vrcp.pop %v871
    %v873 = vmul.f32 %v868, %v872
    %v874 = vlaneseq
    %v875 = vshrl.u32 %v874, 7
    %v876 = vsub.s32 0, %v875
    %v877 = vrot.slane %v873, %v876
    %879 = vbcast.lane.b32.xlu0 %v877, 256
    %v880 = vpop.permute.xlu0 %879
    %v881 = vlaneseq
    %v882 = vshrl.u32 %v881, 7
    %v883 = vsub.s32 1, %v882
    %v884 = vrot.slane %v873, %v883
    %886 = vbcast.lane.b32.xlu0 %v884, 256
    %v887 = vpop.permute.xlu0 %886
    %v888 = vmul.f32 %v880, %v212
    %v889 = vmul.f32 %v887, %v219
    %v890 = vsel %vm220, %v888, 0.0
    %v891 = vrot.slane %v890, 4
    %v892 = vadd.f32 %v890, %v891
    %v893 = vrot.slane %v892, 2
    %v894 = vadd.f32 %v892, %v893
    %v895 = vrot.slane %v894, 1
    %v896 = vadd.f32 %v894, %v895
    %v897 = vsel %vm220, %v889, 0.0
    %v898 = vrot.slane %v897, 4
    %v899 = vadd.f32 %v897, %v898
    %v900 = vrot.slane %v899, 2
    %v901 = vadd.f32 %v899, %v900
    %v902 = vrot.slane %v901, 1
    %v903 = vadd.f32 %v901, %v902
    %v904 = vadd.f32 %v605, %v896
    %v905 = vadd.f32 %v606, %v903
    %s906 = scalar_lea.vmem %s4, 64
    %v907 = vld [vmem:[%s906] sm:$0xff]
    %v908 = vld [vmem:[%s906 + $0x8] sm:$0xff]
    %v909 = vld [vmem:[%s906 + $0x10] sm:$0xff]
    %v910 = vld [vmem:[%s906 + $0x18] sm:$0xff]
    %v913 = vcombine.low %v904, %v905
    %v915 = vunpack.c.l.s4 1966171168
    %v916 = vunpack.c.0.s8 %v915
    %v917 = vlaneseq
    %v918 = vshrl.u32 %v917, 7
    %v919 = vsub.s32 %v916, %v918
    %v920 = vrot.slane %v913, %v919
    %v922 = vunpack.c.l.s4 1966171168
    %v923 = vunpack.c.0.s8 %v922
    %v924 = vlaneseq
    %v925 = vshrl.u32 %v924, 7
    %v926 = vsub.s32 %v923, %v925
    %v927 = vrot.slane %v920, %v926
    %v928 = vsel %vm220, %v927, 0
    %930 = vmatprep.subr.mxu0 0.0
    %931 = vmatpush1.msra.mxu0 0.0
    %932 = vmatprep.subr.mxu0 0.0
    %933 = vmatpush1.msra.mxu0 0.0
    %934 = vmatprep.subr.mxu0 0.0
    %935 = vmatpush1.msra.mxu0 0.0
    %936 = vmatprep.subr.mxu0 0.0
    %937 = vmatpush1.msra.mxu0 0.0
    %938 = vmatprep.subr.mxu0 0.0
    %939 = vmatpush1.msra.mxu0 0.0
    %940 = vmatprep.subr.mxu0 0.0
    %941 = vmatpush1.msra.mxu0 0.0
    %942 = vmatprep.subr.mxu0 0.0
    %943 = vmatpush1.msra.mxu0 0.0
    %944 = vmatprep.subr.mxu0 0.0
    %945 = vmatpush1.msra.mxu0 0.0
    %946 = vmatprep.subr.mxu0 0.0
    %947 = vmatpush1.msra.mxu0 0.0
    %948 = vmatprep.subr.mxu0 0.0
    %949 = vmatpush1.msra.mxu0 0.0
    %950 = vmatprep.subr.mxu0 0.0
    %951 = vmatpush1.msra.mxu0 0.0
    %952 = vmatprep.subr.mxu0 0.0
    %953 = vmatpush1.msra.mxu0 0.0
    %954 = vmatprep.subr.mxu0 0.0
    %955 = vmatpush1.msra.mxu0 %v910
    %956 = vmatprep.subr.mxu0 0.0
    %957 = vmatpush1.msra.mxu0 %v909
    %958 = vmatprep.subr.mxu0 0.0
    %959 = vmatpush1.msra.mxu0 %v908
    %960 = vmatprep.subr.mxu0 0.0
    %961 = vmatpush1.msra.mxu0 %v907
    %962 = vmatprep.subr.mxu0 0.0
    %963 = vmatpush2.msra.mxu0 0.0
    %964 = vmatprep.subr.mxu0 0.0
    %965 = vmatpush2.msra.mxu0 0.0
    %966 = vmatprep.subr.mxu0 0.0
    %967 = vmatpush2.msra.mxu0 0.0
    %968 = vmatprep.subr.mxu0 0.0
    %969 = vmatpush2.msra.mxu0 0.0
    %970 = vmatprep.subr.mxu0 0.0
    %971 = vmatpush2.msra.mxu0 0.0
    %972 = vmatprep.subr.mxu0 0.0
    %973 = vmatpush2.msra.mxu0 0.0
    %974 = vmatprep.subr.mxu0 0.0
    %975 = vmatpush2.msra.mxu0 0.0
    %976 = vmatprep.subr.mxu0 0.0
    %977 = vmatpush2.msra.mxu0 0.0
    %978 = vmatprep.subr.mxu0 0.0
    %979 = vmatpush2.msra.mxu0 0.0
    %980 = vmatprep.subr.mxu0 0.0
    %981 = vmatpush2.msra.mxu0 0.0
    %982 = vmatprep.subr.mxu0 0.0
    %983 = vmatpush2.msra.mxu0 0.0
    %984 = vmatprep.subr.mxu0 0.0
    %985 = vmatpush2.msra.mxu0 0.0
    %986 = vmatprep.subr.mxu0 0.0
    %987 = vmatpush2.msra.mxu0 0.0
    %988 = vmatprep.subr.mxu0 0.0
    %989 = vmatpush2.msra.mxu0 0.0
    %990 = vmatprep.subr.mxu0 0.0
    %991 = vmatpush2.msra.mxu0 0.0
    %992 = vmatprep.subr.mxu0 0.0
    %993 = vmatpush2.msra.mxu0 0.0
    %994 = vmatprep.mubr.f32.mxu0 0.0
    %995 = vmatmul.mubr.f32.gmra.mxu0 %v928
    %v996 = vpop.f32.mrf.mxu0
    %v997 = vadd.f32 0.0, %v996
    %v998 = vpop.f32.mrf.mxu0
    %999 = vdwg.mxu0
    %v1002 = vunpack.c.l.s4 1966171168
    %v1003 = vunpack.c.0.s8 %v1002
    %v1004 = vlaneseq
    %v1005 = vshrl.u32 %v1004, 7
    %v1006 = vsub.s32 %v1003, %v1005
    %v1007 = vrot.slane %v997, %v1006
    %v1008 = vcombine.high %v1007, %v1007
    %v1010 = vunpack.c.l.s4 1966171168
    %v1011 = vunpack.c.0.s8 %v1010
    %v1012 = vlaneseq
    %v1013 = vshrl.u32 %v1012, 7
    %v1014 = vsub.s32 %v1011, %v1013
    %v1015 = vrot.slane %v1007, %v1014
    %v1017 = vunpack.c.l.s4 1966171168
    %v1018 = vunpack.c.0.s8 %v1017
    %v1019 = vlaneseq
    %v1020 = vshrl.u32 %v1019, 7
    %v1021 = vsub.s32 %v1018, %v1020
    %v1022 = vrot.slane %v1008, %v1021
    %v1023 = vlaneseq
    %v1024 = vshrl.u32 %v1023, 7
    %v1025 = vsub.s32 0, %v1024
    %v1026 = vrot.slane %v1015, %v1025
    %v1027 = vlaneseq
    %v1028 = vshrl.u32 %v1027, 7
    %v1029 = vsub.s32 0, %v1028
    %v1030 = vrot.slane %v1022, %v1029
    %1031 = vrot.lane.b32.xlu0 %v1026, 64
    %v1032 = vpop.permute.xlu0 %1031
    %1033 = vrot.lane.b32.xlu0 %v1030, 64
    %v1034 = vpop.permute.xlu0 %1033
    %v1037 = vadd.f32 %v292, %v1032
    %v1038 = vadd.f32 %v297, %v1034
    %v1039 = vtanh.pop %v1037
    %v1040 = vtanh.pop %v1038
    %s1041 = scalar_lea.vmem %s5, 64
    %v1042 = vld [vmem:[%s1041] sm:$0xff]
    %v1043 = vld [vmem:[%s1041 + $0x8] sm:$0xff]
    %v1044 = vld [vmem:[%s1041 + $0x10] sm:$0xff]
    %v1045 = vld [vmem:[%s1041 + $0x18] sm:$0xff]
    %1048 = vrot.lane.b32.xlu0 %v1039, 64
    %v1049 = vpop.permute.xlu0 %1048
    %1050 = vrot.lane.b32.xlu0 %v1040, 64
    %v1051 = vpop.permute.xlu0 %1050
    %v1052 = vsel %vm220, %v1049, 0
    %v1054 = vsel %vm220, %v1051, 0
    %1056 = vmatprep.subr.mxu0 0.0
    %1057 = vmatpush1.msra.mxu0 0.0
    %1058 = vmatprep.subr.mxu0 0.0
    %1059 = vmatpush1.msra.mxu0 0.0
    %1060 = vmatprep.subr.mxu0 0.0
    %1061 = vmatpush1.msra.mxu0 0.0
    %1062 = vmatprep.subr.mxu0 0.0
    %1063 = vmatpush1.msra.mxu0 0.0
    %1064 = vmatprep.subr.mxu0 0.0
    %1065 = vmatpush1.msra.mxu0 0.0
    %1066 = vmatprep.subr.mxu0 0.0
    %1067 = vmatpush1.msra.mxu0 0.0
    %1068 = vmatprep.subr.mxu0 0.0
    %1069 = vmatpush1.msra.mxu0 0.0
    %1070 = vmatprep.subr.mxu0 0.0
    %1071 = vmatpush1.msra.mxu0 0.0
    %1072 = vmatprep.subr.mxu0 0.0
    %1073 = vmatpush1.msra.mxu0 0.0
    %1074 = vmatprep.subr.mxu0 0.0
    %1075 = vmatpush1.msra.mxu0 0.0
    %1076 = vmatprep.subr.mxu0 0.0
    %1077 = vmatpush1.msra.mxu0 0.0
    %1078 = vmatprep.subr.mxu0 0.0
    %1079 = vmatpush1.msra.mxu0 0.0
    %1080 = vmatprep.subr.mxu0 0.0
    %1081 = vmatpush1.msra.mxu0 %v1045
    %1082 = vmatprep.subr.mxu0 0.0
    %1083 = vmatpush1.msra.mxu0 %v1044
    %1084 = vmatprep.subr.mxu0 0.0
    %1085 = vmatpush1.msra.mxu0 %v1043
    %1086 = vmatprep.subr.mxu0 0.0
    %1087 = vmatpush1.msra.mxu0 %v1042
    %1088 = vmatprep.subr.mxu0 0.0
    %1089 = vmatpush2.msra.mxu0 0.0
    %1090 = vmatprep.subr.mxu0 0.0
    %1091 = vmatpush2.msra.mxu0 0.0
    %1092 = vmatprep.subr.mxu0 0.0
    %1093 = vmatpush2.msra.mxu0 0.0
    %1094 = vmatprep.subr.mxu0 0.0
    %1095 = vmatpush2.msra.mxu0 0.0
    %1096 = vmatprep.subr.mxu0 0.0
    %1097 = vmatpush2.msra.mxu0 0.0
    %1098 = vmatprep.subr.mxu0 0.0
    %1099 = vmatpush2.msra.mxu0 0.0
    %1100 = vmatprep.subr.mxu0 0.0
    %1101 = vmatpush2.msra.mxu0 0.0
    %1102 = vmatprep.subr.mxu0 0.0
    %1103 = vmatpush2.msra.mxu0 0.0
    %1104 = vmatprep.subr.mxu0 0.0
    %1105 = vmatpush2.msra.mxu0 0.0
    %1106 = vmatprep.subr.mxu0 0.0
    %1107 = vmatpush2.msra.mxu0 0.0
    %1108 = vmatprep.subr.mxu0 0.0
    %1109 = vmatpush2.msra.mxu0 0.0
    %1110 = vmatprep.subr.mxu0 0.0
    %1111 = vmatpush2.msra.mxu0 0.0
    %1112 = vmatprep.subr.mxu0 0.0
    %1113 = vmatpush2.msra.mxu0 0.0
    %1114 = vmatprep.subr.mxu0 0.0
    %1115 = vmatpush2.msra.mxu0 0.0
    %1116 = vmatprep.subr.mxu0 0.0
    %1117 = vmatpush2.msra.mxu0 0.0
    %1118 = vmatprep.subr.mxu0 0.0
    %1119 = vmatpush2.msra.mxu0 0.0
    %1120 = vmatprep.mubr.f32.mxu0 0.0
    %1121 = vmatmul.mubr.f32.gmra.mxu0 %v1052
    %v1122 = vpop.f32.mrf.mxu0
    %v1123 = vadd.f32 0.0, %v1122
    %v1124 = vpop.f32.mrf.mxu0
    %1125 = vmatprep.mubr.f32.mxu0 0.0
    %1126 = vmatmul.mubr.f32.gmra.mxu0 %v1054
    %v1127 = vpop.f32.mrf.mxu0
    %v1128 = vadd.f32 0.0, %v1127
    %v1129 = vpop.f32.mrf.mxu0
    %1130 = vdwg.mxu0
    %v1131 = vtanh.pop %v1123
    %v1132 = vtanh.pop %v1128
    %s1133 = scalar_lea.vmem %s6, 2
    %v1134 = vld [vmem:[%s1133] sm:$0x1]
    %v1136 = vlaneseq
    %v1137 = vshrl.u32 %v1136, 7
    %v1138 = vsub.s32 0, %v1137
    %v1139 = vrot.slane %v1134, %v1138
    %v1141 = vmul.f32 %v1131, %v1139
    %v1142 = vmul.f32 %v1132, %v1139
    %v1143 = vsel %vm541, %v1141, 0.0
    %1144 = vadd.xlane.f32.xlu0 %v1143
    %v1145 = vpop.xlane.xlu0 %1144
    %v1146 = vsel %vm541, %v1142, 0.0
    %1147 = vadd.xlane.f32.xlu0 %v1146
    %v1148 = vpop.xlane.xlu0 %1147
    %v1151 = vlaneseq
    %v1152 = vshrl.u32 %v1151, 7
    %v1153 = vsub.s32 %v304, %v1152
    %v1154 = vrot.slane %v1145, %v1153
    %v1155 = vlaneseq
    %v1156 = vshrl.u32 %v1155, 7
    %v1157 = vsub.s32 %v304, %v1156
    %v1158 = vrot.slane %v1148, %v1157
    %v1159 = vsel %vm199, %v1158, %v1154
    %v1161 = vsel %vm314, %v1159, -1e+32
    %v1162 = vsel %vm561, %v1161, -inf
    %1163 = vmax.xlane.f32.xlu0 %v1162
    %v1164 = vpop.xlane.xlu0 %1163
    %v1165 = vsub.f32 %v1161, %v1164
    %v1166 = vmul.f32 %v1165, 1.442695
    %v1167 = vpow.pop %v1166
    %v1168 = vsel %vm561, %v1167, 0.0
    %1169 = vadd.xlane.f32.xlu0 %v1168
    %v1170 = vpop.xlane.xlu0 %1169
    %v1171 = vrcp.pop %v1170
    %v1172 = vmul.f32 %v1167, %v1171
    %v1173 = vlaneseq
    %v1174 = vshrl.u32 %v1173, 7
    %v1175 = vsub.s32 0, %v1174
    %v1176 = vrot.slane %v1172, %v1175
    %1178 = vbcast.lane.b32.xlu0 %v1176, 256
    %v1179 = vpop.permute.xlu0 %1178
    %v1180 = vlaneseq
    %v1181 = vshrl.u32 %v1180, 7
    %v1182 = vsub.s32 1, %v1181
    %v1183 = vrot.slane %v1172, %v1182
    %1185 = vbcast.lane.b32.xlu0 %v1183, 256
    %v1186 = vpop.permute.xlu0 %1185
    %v1187 = vmul.f32 %v1179, %v212
    %v1188 = vmul.f32 %v1186, %v219
    %v1189 = vsel %vm220, %v1187, 0.0
    %v1190 = vrot.slane %v1189, 4
    %v1191 = vadd.f32 %v1189, %v1190
    %v1192 = vrot.slane %v1191, 2
    %v1193 = vadd.f32 %v1191, %v1192
    %v1194 = vrot.slane %v1193, 1
    %v1195 = vadd.f32 %v1193, %v1194
    %v1196 = vsel %vm220, %v1188, 0.0
    %v1197 = vrot.slane %v1196, 4
    %v1198 = vadd.f32 %v1196, %v1197
    %v1199 = vrot.slane %v1198, 2
    %v1200 = vadd.f32 %v1198, %v1199
    %v1201 = vrot.slane %v1200, 1
    %v1202 = vadd.f32 %v1200, %v1201
    %vm1203 = vcmask 253952
    %1204 = vst.msk [vmem:[#allocation4] sm:$0x1] %vm1203, %v1195
    %1205 = vst.msk [vmem:[#allocation4 + $0x1] sm:$0x1] %vm1203, %v1202
    // Predicated region
    $region26: #{tpu_custom_call.1} parent=1 // pred_check
      _
    $region27: #{tpu_custom_call.1} parent=1 // pred_check_branch
      %1207 = sbr.rel (0) target = $region29
    $region28: #{tpu_custom_call.1} parent=1 // pred_region
      %s1209 = ssub.s32 32, 32
      %1210 = vsyncadd [#allocation5], %s1209
      %s1211 = sshll.u32 [#allocation4], 4
      %s1212 = int_to_ptr.vmem [resolvable:$true] %s1211
      %1217 = dma.vmem_to_hbm [thread:$0]  %s1212, 32, %s7, [#allocation5], 16, 16, 1
    $region29: #{tpu_custom_call.1} parent=1 // pred_fallthru
      _
    // Predicated region
    $region30: #{tpu_custom_call.1} parent=1 // pred_check
      _
    $region31: #{tpu_custom_call.1} parent=1 // pred_check_branch
      %1219 = sbr.rel (0) target = $region33
    $region32: #{tpu_custom_call.1} parent=1 // pred_region
      %1220 = dma.done [#allocation5], 32
    $region33: #{tpu_custom_call.1} parent=1 // pred_fallthru
      _
    %1221 = vsyncpa [#allocation5], 1

</llo_original>
